<compile_context>
chip_gen: v7x
topology: tpu7x:2x2x1
jax: 0.10.0
libtpu: 0.0.40
codegen_flags: <defaults>
</compile_context>

<pallas_src>
import functools

import jax
import jax.numpy as jnp
import numpy as np
from jax import lax
from jax.experimental import pallas as pl
from jax.experimental.pallas import tpu as pltpu

LANE = 128          # TPU lane width; the folded signal's last dim.
SUB = 8             # sublane strip height processed per inner-loop step.
MIN_GRID_STEPS = 4  # target minimum number of grid steps (pipelining / 2 TCs).


# ----------------------------------------------------------------------------
# Kernel
# ----------------------------------------------------------------------------
def _make_kernel(num):
    """Kernel factory; `num` is static so channel/center loops fully unroll."""
    NN = num * num
    # Offsets into the flat SMEM parameter vector (must match _pack_params).
    OFF_CR = 0                 # c.real                  (num*num)
    OFF_CI = OFF_CR + NN       # c.imag
    OFF_NSR = OFF_CI + NN      # -sigma.real
    OFF_NSI = OFF_NSR + NN     # -sigma.imag
    OFF_FCR = OFF_NSI + NN     # fc.real
    OFF_FCI = OFF_FCR + NN     # fc.imag
    OFF_W3R = OFF_FCI + NN     # L3 weight real          (num,)
    OFF_W3I = OFF_W3R + num    # L3 weight imag

    def kernel(x1_ref, p_ref, out_ref):
        # x1_ref : (2*num, TR, 128) VMEM -- rows 0..num-1 real, num..2num-1 imag
        #                                   planes of the L1 conv output.
        # p_ref  : (P,)             SMEM -- flat packed parameters (scalars).
        # out_ref: (2, TR, 128)     VMEM -- row 0 real, row 1 imag result.
        TR = out_ref.shape[1]
        nstrips = TR // SUB

        def strip_body(r0):
            rows = pl.ds(r0, SUB)
            y_r = None
            y_i = None
            for c in range(num):
                x1r = x1_ref[c, rows, :]
                x1i = x1_ref[num + c, rows, :]
                # TODO(synk): magnitude via sqrt(r^2 + i^2) (not hypot); fine
                # for normalized inputs, may under/overflow for extreme |x1|.
                mag = jnp.sqrt(x1r * x1r + x1i * x1i)

                # ---- L2: RBF over the centers (compact, well-conditioned).
                o_r = None
                o_i = None
                for j in range(num):
                    base = c * num + j
                    dr = mag - p_ref[OFF_CR + base]
                    di = mag - p_ref[OFF_CI + base]
                    er = p_ref[OFF_FCR + base] * jnp.exp(
                        dr * dr * p_ref[OFF_NSR + base])
                    ei = p_ref[OFF_FCI + base] * jnp.exp(
                        di * di * p_ref[OFF_NSI + base])
                    o_r = er if o_r is None else o_r + er
                    o_i = ei if o_i is None else o_i + ei

                # out * x + x   (complex)
                x2_r = o_r * x1r - o_i * x1i + x1r
                x2_i = o_r * x1i + o_i * x1r + x1i

                # ---- L3: Conv1d(num -> 1, kernel 1) == complex channel sum.
                w3r = p_ref[OFF_W3R + c]
                w3i = p_ref[OFF_W3I + c]
                t_r = w3r * x2_r - w3i * x2_i
                t_i = w3r * x2_i + w3i * x2_r
                y_r = t_r if y_r is None else y_r + t_r
                y_i = t_i if y_i is None else y_i + t_i

            out_ref[0, rows, :] = y_r
            out_ref[1, rows, :] = y_i

        if nstrips == 1:
            strip_body(0)
        else:
            def loop_body(s, carry):
                strip_body(pl.multiple_of(s * SUB, SUB))
                return carry
            lax.fori_loop(0, nstrips, loop_body, 0)

    return kernel


# ----------------------------------------------------------------------------
# Wrapper
# ----------------------------------------------------------------------------
def _pack_params(params):
    """Flatten RBF + L3 parameters into one f32 vector (SMEM-bound).

    Order must match the OFF_* constants in _make_kernel.  sigma is stored
    negated so the kernel computes exp((|x|-c)^2 * (-sigma)) directly.
    """
    c, sigma, fc, w3 = params["c"], params["sigma"], params["fc"], params["w3"]
    num = c.shape[0]
    cr, ci = jnp.real(c[:, 0, :]), jnp.imag(c[:, 0, :])          # (num, num)
    nsr, nsi = -jnp.real(sigma[:, 0, :]), -jnp.imag(sigma[:, 0, :])
    fcr, fci = jnp.real(fc[:, :, 0]), jnp.imag(fc[:, :, 0])      # (num, num)
    w3r, w3i = jnp.real(w3[0, :, 0]), jnp.imag(w3[0, :, 0])      # (num,)
    pieces = [cr.reshape(-1), ci.reshape(-1),
              nsr.reshape(-1), nsi.reshape(-1),
              fcr.reshape(-1), fci.reshape(-1),
              w3r.reshape(-1), w3i.reshape(-1)]
    return jnp.concatenate(pieces).astype(jnp.float32), num


def mymodel_forward(x, params, *, block_rows=256):
    """x: complex (L,) -> complex64 (L,).

    block_rows: max rows (of 128 lanes) per grid step; must be a multiple of 8.
    """
    assert block_rows % SUB == 0
    pflat, num = _pack_params(params)
    w1 = params["w1"]                       # (num, 1, K) complex
    K = w1.shape[2]
    assert K % 2 == 1, "'same' padding below assumes an odd conv kernel"
    L = x.shape[0]

    # ---- Tiling: 8-aligned rows, tile capped so the grid has >= MIN steps.
    R = (L + LANE - 1) // LANE                       # rows of 128 lanes
    R8 = ((R + SUB - 1) // SUB) * SUB                # 8-aligned row count
    tr_cap = max(SUB, (R8 // MIN_GRID_STEPS) // SUB * SUB)
    TR = min(block_rows, tr_cap)                     # rows per grid step
    Rp = ((R8 + TR - 1) // TR) * TR                  # padded row count
    Lp = Rp * LANE
    grid = (Rp // TR,)

    # ---- L1: complex 'same' Conv1d(1 -> num, kernel K) on the MXU, in the
    # wrapper, as ONE real conv: 2 in-channels [re, im], 2*num out-channels
    # [num real planes, num imag planes].
    wr = jnp.real(w1[:, 0, :]).astype(jnp.float32)   # (num, K)
    wi = jnp.imag(w1[:, 0, :]).astype(jnp.float32)
    w_all = jnp.concatenate(
        [jnp.stack([wr, -wi], axis=1),               # -> real planes
         jnp.stack([wi, wr], axis=1)], axis=0)       # -> imag planes  (2num,2,K)

    xr = jnp.real(x).astype(jnp.float32)
    xi = jnp.imag(x).astype(jnp.float32)
    x_pad = jnp.stack([jnp.pad(xr, (0, Lp - L)),
                       jnp.pad(xi, (0, Lp - L))], axis=0)          # (2, Lp)
    x1 = lax.conv_general_dilated(
        x_pad[None], w_all, window_strides=(1,), padding="SAME",
        dimension_numbers=("NCH", "OIH", "NCH"),
        precision=lax.Precision.HIGHEST)[0]                        # (2num, Lp)
    x1 = x1.reshape(2 * num, Rp, LANE)

    out = pl.pallas_call(
        _make_kernel(num),
        out_shape=jax.ShapeDtypeStruct((2, Rp, LANE), jnp.float32),
        grid=grid,
        in_specs=[
            pl.BlockSpec((2 * num, TR, LANE), lambda i: (0, i, 0)),
            pl.BlockSpec(memory_space=pltpu.MemorySpace.SMEM),
        ],
        out_specs=pl.BlockSpec((2, TR, LANE), lambda i: (0, i, 0)),
        compiler_params=pltpu.CompilerParams(
            dimension_semantics=("parallel",)),
    )(x1, pflat)

    y = out[0].reshape(Lp)[:L] + 1j * out[1].reshape(Lp)[:L]
    return y.astype(jnp.complex64)


# ----------------------------------------------------------------------------
# Reference + test harness
# ----------------------------------------------------------------------------
def init_params(key, num):
    """Deterministic synthetic params with the same shapes as the PyTorch module."""
    K = 2 * num + 1
    ks = jax.random.split(key, 10)

    def cplx(kr, ki, shape, scale=0.1):
        return (scale * jax.random.normal(kr, shape, jnp.float32)
                + 1j * scale * jax.random.normal(ki, shape, jnp.float32)
                ).astype(jnp.complex64)

    return {
        "w1": cplx(ks[0], ks[1], (num, 1, K)),       # L1.weight
        "c": cplx(ks[2], ks[3], (num, 1, num)),      # RBF.c
        "sigma": cplx(ks[4], ks[5], (num, 1, num)),  # RBF.sigma
        "fc": cplx(ks[6], ks[7], (num, num, 1)),     # RBF.fc
        "w3": cplx(ks[8], ks[9], (1, num, 1)),       # L3.weight
    }


def ref_forward(x, params):
    """Pure-JAX reference mirroring the PyTorch forward (complex arithmetic)."""
    w1, c, sigma, fc, w3 = (params["w1"], params["c"], params["sigma"],
                            params["fc"], params["w3"])
    num, K, L = w1.shape[0], w1.shape[2], x.shape[0]
    pad = (K - 1) // 2
    x = x.astype(jnp.complex64)
    xp = jnp.pad(x, (pad, pad))
    windows = jnp.stack([xp[k:k + L] for k in range(K)], axis=0)      # (K, L)
    x1 = jnp.einsum("ck,kl->cl", w1[:, 0, :], windows,
                    precision=lax.Precision.HIGHEST)                  # (num, L)
    x_abs = jnp.abs(x1)[:, :, None]                                   # (num, L, 1)
    distr = jnp.exp(-(x_abs - jnp.real(c)) ** 2 * jnp.real(sigma))    # (num, L, num)
    disti = jnp.exp(-(x_abs - jnp.imag(c)) ** 2 * jnp.imag(sigma))
    outr = jnp.einsum("blj,bjo->blo", distr, jnp.real(fc),
                      precision=lax.Precision.HIGHEST)[..., 0]
    outi = jnp.einsum("blj,bjo->blo", disti, jnp.imag(fc),
                      precision=lax.Precision.HIGHEST)[..., 0]
    out = outr + 1j * outi
    x2 = out * x1 + x1
    x3 = jnp.sum(w3[0, :, 0][:, None] * x2, axis=0)
    return x3.astype(jnp.complex64)


if __name__ == "__main__":
    num = 4        # MyModel(num): L1 has `num` out-channels, kernel 2*num+1 = 9
    key = jax.random.PRNGKey(0)
    params = init_params(jax.random.fold_in(key, 1), num)

    fwd = jax.jit(functools.partial(mymodel_forward, block_rows=256))

    # 2048  -> 16 rows  : TR=8,  grid=2, 1 strip / block
    # 3000  -> 24 rows  : TR=8,  grid=3, padded tail exercised
    # 40960 -> 320 rows : TR=80, grid=4, 10 strips / block (fori_loop path)
    for L in (2048, 3000, 40960):
        kx_r, kx_i = jax.random.split(jax.random.fold_in(key, L))
        x = (jax.random.normal(kx_r, (L,), jnp.float32)
             + 1j * jax.random.normal(kx_i, (L,), jnp.float32)
             ).astype(jnp.complex64)
        y = jax.block_until_ready(fwd(x, params))
        y_ref = ref_forward(x, params)
        np.testing.assert_allclose(np.asarray(y), np.asarray(y_ref),
                                   rtol=1e-3, atol=1e-4)

    print("KERNEL_OK")
</pallas_src>

<mosaic_0001>
module attributes {stable_mosaic.version = 11 : i64} {
  func.func @kernel(%arg0: i32, %arg1: memref<8x8x128xf32, #tpu.memory_space<vmem>>, %arg2: memref<104xf32, #tpu.memory_space<smem>>, %arg3: memref<2x8x128xf32, #tpu.memory_space<vmem>>) attributes {dimension_semantics = [#tpu.dimension_semantics<parallel>], iteration_bounds = array<i64: 2>, scalar_prefetch = 0 : i64, scratch_operands = 0 : i64, tpu.core_type = #tpu.core_type<tc>, window_params = [{transform_indices = @transform_0, window_bounds = array<i64: 8, 8, 128>}, {transform_indices = @transform_1, window_bounds = array<i64: 104>}, {transform_indices = @transform_2, window_bounds = array<i64: 2, 8, 128>}]} {
    %c0 = arith.constant 0 : index
    %c0_0 = arith.constant 0 : index
    %c0_1 = arith.constant 0 : index
    %0 = vector.load %arg1[%c0, %c0_0, %c0_1] : memref<8x8x128xf32, #tpu.memory_space<vmem>>, vector<1x8x128xf32>
    %1 = vector.shape_cast %0 : vector<1x8x128xf32> to vector<8x128xf32>
    %c4 = arith.constant 4 : index
    %c0_2 = arith.constant 0 : index
    %c0_3 = arith.constant 0 : index
    %2 = vector.load %arg1[%c4, %c0_2, %c0_3] : memref<8x8x128xf32, #tpu.memory_space<vmem>>, vector<1x8x128xf32>
    %3 = vector.shape_cast %2 : vector<1x8x128xf32> to vector<8x128xf32>
    %4 = arith.mulf %1, %1 : vector<8x128xf32>
    %5 = arith.mulf %3, %3 : vector<8x128xf32>
    %6 = arith.addf %4, %5 : vector<8x128xf32>
    %7 = math.sqrt %6 : vector<8x128xf32>
    %c0_4 = arith.constant 0 : index
    %8 = memref.load %arg2[%c0_4] : memref<104xf32, #tpu.memory_space<smem>>
    %9 = vector.broadcast %8 : f32 to vector<8x128xf32>
    %10 = arith.subf %7, %9 : vector<8x128xf32>
    %c16 = arith.constant 16 : index
    %11 = memref.load %arg2[%c16] : memref<104xf32, #tpu.memory_space<smem>>
    %12 = vector.broadcast %11 : f32 to vector<8x128xf32>
    %13 = arith.subf %7, %12 : vector<8x128xf32>
    %c64 = arith.constant 64 : index
    %14 = memref.load %arg2[%c64] : memref<104xf32, #tpu.memory_space<smem>>
    %15 = arith.mulf %10, %10 : vector<8x128xf32>
    %c32 = arith.constant 32 : index
    %16 = memref.load %arg2[%c32] : memref<104xf32, #tpu.memory_space<smem>>
    %17 = vector.broadcast %16 : f32 to vector<8x128xf32>
    %18 = arith.mulf %15, %17 : vector<8x128xf32>
    %19 = math.exp %18 : vector<8x128xf32>
    %20 = vector.broadcast %14 : f32 to vector<8x128xf32>
    %21 = arith.mulf %20, %19 : vector<8x128xf32>
    %c80 = arith.constant 80 : index
    %22 = memref.load %arg2[%c80] : memref<104xf32, #tpu.memory_space<smem>>
    %23 = arith.mulf %13, %13 : vector<8x128xf32>
    %c48 = arith.constant 48 : index
    %24 = memref.load %arg2[%c48] : memref<104xf32, #tpu.memory_space<smem>>
    %25 = vector.broadcast %24 : f32 to vector<8x128xf32>
    %26 = arith.mulf %23, %25 : vector<8x128xf32>
    %27 = math.exp %26 : vector<8x128xf32>
    %28 = vector.broadcast %22 : f32 to vector<8x128xf32>
    %29 = arith.mulf %28, %27 : vector<8x128xf32>
    %c1 = arith.constant 1 : index
    %30 = memref.load %arg2[%c1] : memref<104xf32, #tpu.memory_space<smem>>
    %31 = vector.broadcast %30 : f32 to vector<8x128xf32>
    %32 = arith.subf %7, %31 : vector<8x128xf32>
    %c17 = arith.constant 17 : index
    %33 = memref.load %arg2[%c17] : memref<104xf32, #tpu.memory_space<smem>>
    %34 = vector.broadcast %33 : f32 to vector<8x128xf32>
    %35 = arith.subf %7, %34 : vector<8x128xf32>
    %c65 = arith.constant 65 : index
    %36 = memref.load %arg2[%c65] : memref<104xf32, #tpu.memory_space<smem>>
    %37 = arith.mulf %32, %32 : vector<8x128xf32>
    %c33 = arith.constant 33 : index
    %38 = memref.load %arg2[%c33] : memref<104xf32, #tpu.memory_space<smem>>
    %39 = vector.broadcast %38 : f32 to vector<8x128xf32>
    %40 = arith.mulf %37, %39 : vector<8x128xf32>
    %41 = math.exp %40 : vector<8x128xf32>
    %42 = vector.broadcast %36 : f32 to vector<8x128xf32>
    %43 = arith.mulf %42, %41 : vector<8x128xf32>
    %c81 = arith.constant 81 : index
    %44 = memref.load %arg2[%c81] : memref<104xf32, #tpu.memory_space<smem>>
    %45 = arith.mulf %35, %35 : vector<8x128xf32>
    %c49 = arith.constant 49 : index
    %46 = memref.load %arg2[%c49] : memref<104xf32, #tpu.memory_space<smem>>
    %47 = vector.broadcast %46 : f32 to vector<8x128xf32>
    %48 = arith.mulf %45, %47 : vector<8x128xf32>
    %49 = math.exp %48 : vector<8x128xf32>
    %50 = vector.broadcast %44 : f32 to vector<8x128xf32>
    %51 = arith.mulf %50, %49 : vector<8x128xf32>
    %52 = arith.addf %21, %43 : vector<8x128xf32>
    %53 = arith.addf %29, %51 : vector<8x128xf32>
    %c2 = arith.constant 2 : index
    %54 = memref.load %arg2[%c2] : memref<104xf32, #tpu.memory_space<smem>>
    %55 = vector.broadcast %54 : f32 to vector<8x128xf32>
    %56 = arith.subf %7, %55 : vector<8x128xf32>
    %c18 = arith.constant 18 : index
    %57 = memref.load %arg2[%c18] : memref<104xf32, #tpu.memory_space<smem>>
    %58 = vector.broadcast %57 : f32 to vector<8x128xf32>
    %59 = arith.subf %7, %58 : vector<8x128xf32>
    %c66 = arith.constant 66 : index
    %60 = memref.load %arg2[%c66] : memref<104xf32, #tpu.memory_space<smem>>
    %61 = arith.mulf %56, %56 : vector<8x128xf32>
    %c34 = arith.constant 34 : index
    %62 = memref.load %arg2[%c34] : memref<104xf32, #tpu.memory_space<smem>>
    %63 = vector.broadcast %62 : f32 to vector<8x128xf32>
    %64 = arith.mulf %61, %63 : vector<8x128xf32>
    %65 = math.exp %64 : vector<8x128xf32>
    %66 = vector.broadcast %60 : f32 to vector<8x128xf32>
    %67 = arith.mulf %66, %65 : vector<8x128xf32>
    %c82 = arith.constant 82 : index
    %68 = memref.load %arg2[%c82] : memref<104xf32, #tpu.memory_space<smem>>
    %69 = arith.mulf %59, %59 : vector<8x128xf32>
    %c50 = arith.constant 50 : index
    %70 = memref.load %arg2[%c50] : memref<104xf32, #tpu.memory_space<smem>>
    %71 = vector.broadcast %70 : f32 to vector<8x128xf32>
    %72 = arith.mulf %69, %71 : vector<8x128xf32>
    %73 = math.exp %72 : vector<8x128xf32>
    %74 = vector.broadcast %68 : f32 to vector<8x128xf32>
    %75 = arith.mulf %74, %73 : vector<8x128xf32>
    %76 = arith.addf %52, %67 : vector<8x128xf32>
    %77 = arith.addf %53, %75 : vector<8x128xf32>
    %c3 = arith.constant 3 : index
    %78 = memref.load %arg2[%c3] : memref<104xf32, #tpu.memory_space<smem>>
    %79 = vector.broadcast %78 : f32 to vector<8x128xf32>
    %80 = arith.subf %7, %79 : vector<8x128xf32>
    %c19 = arith.constant 19 : index
    %81 = memref.load %arg2[%c19] : memref<104xf32, #tpu.memory_space<smem>>
    %82 = vector.broadcast %81 : f32 to vector<8x128xf32>
    %83 = arith.subf %7, %82 : vector<8x128xf32>
    %c67 = arith.constant 67 : index
    %84 = memref.load %arg2[%c67] : memref<104xf32, #tpu.memory_space<smem>>
    %85 = arith.mulf %80, %80 : vector<8x128xf32>
    %c35 = arith.constant 35 : index
    %86 = memref.load %arg2[%c35] : memref<104xf32, #tpu.memory_space<smem>>
    %87 = vector.broadcast %86 : f32 to vector<8x128xf32>
    %88 = arith.mulf %85, %87 : vector<8x128xf32>
    %89 = math.exp %88 : vector<8x128xf32>
    %90 = vector.broadcast %84 : f32 to vector<8x128xf32>
    %91 = arith.mulf %90, %89 : vector<8x128xf32>
    %c83 = arith.constant 83 : index
    %92 = memref.load %arg2[%c83] : memref<104xf32, #tpu.memory_space<smem>>
    %93 = arith.mulf %83, %83 : vector<8x128xf32>
    %c51 = arith.constant 51 : index
    %94 = memref.load %arg2[%c51] : memref<104xf32, #tpu.memory_space<smem>>
    %95 = vector.broadcast %94 : f32 to vector<8x128xf32>
    %96 = arith.mulf %93, %95 : vector<8x128xf32>
    %97 = math.exp %96 : vector<8x128xf32>
    %98 = vector.broadcast %92 : f32 to vector<8x128xf32>
    %99 = arith.mulf %98, %97 : vector<8x128xf32>
    %100 = arith.addf %76, %91 : vector<8x128xf32>
    %101 = arith.addf %77, %99 : vector<8x128xf32>
    %102 = arith.mulf %100, %1 : vector<8x128xf32>
    %103 = arith.mulf %101, %3 : vector<8x128xf32>
    %104 = arith.subf %102, %103 : vector<8x128xf32>
    %105 = arith.addf %104, %1 : vector<8x128xf32>
    %106 = arith.mulf %100, %3 : vector<8x128xf32>
    %107 = arith.mulf %101, %1 : vector<8x128xf32>
    %108 = arith.addf %106, %107 : vector<8x128xf32>
    %109 = arith.addf %108, %3 : vector<8x128xf32>
    %c96 = arith.constant 96 : index
    %110 = memref.load %arg2[%c96] : memref<104xf32, #tpu.memory_space<smem>>
    %c100 = arith.constant 100 : index
    %111 = memref.load %arg2[%c100] : memref<104xf32, #tpu.memory_space<smem>>
    %112 = vector.broadcast %110 : f32 to vector<8x128xf32>
    %113 = arith.mulf %112, %105 : vector<8x128xf32>
    %114 = vector.broadcast %111 : f32 to vector<8x128xf32>
    %115 = arith.mulf %114, %109 : vector<8x128xf32>
    %116 = arith.subf %113, %115 : vector<8x128xf32>
    %117 = vector.broadcast %110 : f32 to vector<8x128xf32>
    %118 = arith.mulf %117, %109 : vector<8x128xf32>
    %119 = vector.broadcast %111 : f32 to vector<8x128xf32>
    %120 = arith.mulf %119, %105 : vector<8x128xf32>
    %121 = arith.addf %118, %120 : vector<8x128xf32>
    %c1_5 = arith.constant 1 : index
    %c0_6 = arith.constant 0 : index
    %c0_7 = arith.constant 0 : index
    %122 = vector.load %arg1[%c1_5, %c0_6, %c0_7] : memref<8x8x128xf32, #tpu.memory_space<vmem>>, vector<1x8x128xf32>
    %123 = vector.shape_cast %122 : vector<1x8x128xf32> to vector<8x128xf32>
    %c5 = arith.constant 5 : index
    %c0_8 = arith.constant 0 : index
    %c0_9 = arith.constant 0 : index
    %124 = vector.load %arg1[%c5, %c0_8, %c0_9] : memref<8x8x128xf32, #tpu.memory_space<vmem>>, vector<1x8x128xf32>
    %125 = vector.shape_cast %124 : vector<1x8x128xf32> to vector<8x128xf32>
    %126 = arith.mulf %123, %123 : vector<8x128xf32>
    %127 = arith.mulf %125, %125 : vector<8x128xf32>
    %128 = arith.addf %126, %127 : vector<8x128xf32>
    %129 = math.sqrt %128 : vector<8x128xf32>
    %c4_10 = arith.constant 4 : index
    %130 = memref.load %arg2[%c4_10] : memref<104xf32, #tpu.memory_space<smem>>
    %131 = vector.broadcast %130 : f32 to vector<8x128xf32>
    %132 = arith.subf %129, %131 : vector<8x128xf32>
    %c20 = arith.constant 20 : index
    %133 = memref.load %arg2[%c20] : memref<104xf32, #tpu.memory_space<smem>>
    %134 = vector.broadcast %133 : f32 to vector<8x128xf32>
    %135 = arith.subf %129, %134 : vector<8x128xf32>
    %c68 = arith.constant 68 : index
    %136 = memref.load %arg2[%c68] : memref<104xf32, #tpu.memory_space<smem>>
    %137 = arith.mulf %132, %132 : vector<8x128xf32>
    %c36 = arith.constant 36 : index
    %138 = memref.load %arg2[%c36] : memref<104xf32, #tpu.memory_space<smem>>
    %139 = vector.broadcast %138 : f32 to vector<8x128xf32>
    %140 = arith.mulf %137, %139 : vector<8x128xf32>
    %141 = math.exp %140 : vector<8x128xf32>
    %142 = vector.broadcast %136 : f32 to vector<8x128xf32>
    %143 = arith.mulf %142, %141 : vector<8x128xf32>
    %c84 = arith.constant 84 : index
    %144 = memref.load %arg2[%c84] : memref<104xf32, #tpu.memory_space<smem>>
    %145 = arith.mulf %135, %135 : vector<8x128xf32>
    %c52 = arith.constant 52 : index
    %146 = memref.load %arg2[%c52] : memref<104xf32, #tpu.memory_space<smem>>
    %147 = vector.broadcast %146 : f32 to vector<8x128xf32>
    %148 = arith.mulf %145, %147 : vector<8x128xf32>
    %149 = math.exp %148 : vector<8x128xf32>
    %150 = vector.broadcast %144 : f32 to vector<8x128xf32>
    %151 = arith.mulf %150, %149 : vector<8x128xf32>
    %c5_11 = arith.constant 5 : index
    %152 = memref.load %arg2[%c5_11] : memref<104xf32, #tpu.memory_space<smem>>
    %153 = vector.broadcast %152 : f32 to vector<8x128xf32>
    %154 = arith.subf %129, %153 : vector<8x128xf32>
    %c21 = arith.constant 21 : index
    %155 = memref.load %arg2[%c21] : memref<104xf32, #tpu.memory_space<smem>>
    %156 = vector.broadcast %155 : f32 to vector<8x128xf32>
    %157 = arith.subf %129, %156 : vector<8x128xf32>
    %c69 = arith.constant 69 : index
    %158 = memref.load %arg2[%c69] : memref<104xf32, #tpu.memory_space<smem>>
    %159 = arith.mulf %154, %154 : vector<8x128xf32>
    %c37 = arith.constant 37 : index
    %160 = memref.load %arg2[%c37] : memref<104xf32, #tpu.memory_space<smem>>
    %161 = vector.broadcast %160 : f32 to vector<8x128xf32>
    %162 = arith.mulf %159, %161 : vector<8x128xf32>
    %163 = math.exp %162 : vector<8x128xf32>
    %164 = vector.broadcast %158 : f32 to vector<8x128xf32>
    %165 = arith.mulf %164, %163 : vector<8x128xf32>
    %c85 = arith.constant 85 : index
    %166 = memref.load %arg2[%c85] : memref<104xf32, #tpu.memory_space<smem>>
    %167 = arith.mulf %157, %157 : vector<8x128xf32>
    %c53 = arith.constant 53 : index
    %168 = memref.load %arg2[%c53] : memref<104xf32, #tpu.memory_space<smem>>
    %169 = vector.broadcast %168 : f32 to vector<8x128xf32>
    %170 = arith.mulf %167, %169 : vector<8x128xf32>
    %171 = math.exp %170 : vector<8x128xf32>
    %172 = vector.broadcast %166 : f32 to vector<8x128xf32>
    %173 = arith.mulf %172, %171 : vector<8x128xf32>
    %174 = arith.addf %143, %165 : vector<8x128xf32>
    %175 = arith.addf %151, %173 : vector<8x128xf32>
    %c6 = arith.constant 6 : index
    %176 = memref.load %arg2[%c6] : memref<104xf32, #tpu.memory_space<smem>>
    %177 = vector.broadcast %176 : f32 to vector<8x128xf32>
    %178 = arith.subf %129, %177 : vector<8x128xf32>
    %c22 = arith.constant 22 : index
    %179 = memref.load %arg2[%c22] : memref<104xf32, #tpu.memory_space<smem>>
    %180 = vector.broadcast %179 : f32 to vector<8x128xf32>
    %181 = arith.subf %129, %180 : vector<8x128xf32>
    %c70 = arith.constant 70 : index
    %182 = memref.load %arg2[%c70] : memref<104xf32, #tpu.memory_space<smem>>
    %183 = arith.mulf %178, %178 : vector<8x128xf32>
    %c38 = arith.constant 38 : index
    %184 = memref.load %arg2[%c38] : memref<104xf32, #tpu.memory_space<smem>>
    %185 = vector.broadcast %184 : f32 to vector<8x128xf32>
    %186 = arith.mulf %183, %185 : vector<8x128xf32>
    %187 = math.exp %186 : vector<8x128xf32>
    %188 = vector.broadcast %182 : f32 to vector<8x128xf32>
    %189 = arith.mulf %188, %187 : vector<8x128xf32>
    %c86 = arith.constant 86 : index
    %190 = memref.load %arg2[%c86] : memref<104xf32, #tpu.memory_space<smem>>
    %191 = arith.mulf %181, %181 : vector<8x128xf32>
    %c54 = arith.constant 54 : index
    %192 = memref.load %arg2[%c54] : memref<104xf32, #tpu.memory_space<smem>>
    %193 = vector.broadcast %192 : f32 to vector<8x128xf32>
    %194 = arith.mulf %191, %193 : vector<8x128xf32>
    %195 = math.exp %194 : vector<8x128xf32>
    %196 = vector.broadcast %190 : f32 to vector<8x128xf32>
    %197 = arith.mulf %196, %195 : vector<8x128xf32>
    %198 = arith.addf %174, %189 : vector<8x128xf32>
    %199 = arith.addf %175, %197 : vector<8x128xf32>
    %c7 = arith.constant 7 : index
    %200 = memref.load %arg2[%c7] : memref<104xf32, #tpu.memory_space<smem>>
    %201 = vector.broadcast %200 : f32 to vector<8x128xf32>
    %202 = arith.subf %129, %201 : vector<8x128xf32>
    %c23 = arith.constant 23 : index
    %203 = memref.load %arg2[%c23] : memref<104xf32, #tpu.memory_space<smem>>
    %204 = vector.broadcast %203 : f32 to vector<8x128xf32>
    %205 = arith.subf %129, %204 : vector<8x128xf32>
    %c71 = arith.constant 71 : index
    %206 = memref.load %arg2[%c71] : memref<104xf32, #tpu.memory_space<smem>>
    %207 = arith.mulf %202, %202 : vector<8x128xf32>
    %c39 = arith.constant 39 : index
    %208 = memref.load %arg2[%c39] : memref<104xf32, #tpu.memory_space<smem>>
    %209 = vector.broadcast %208 : f32 to vector<8x128xf32>
    %210 = arith.mulf %207, %209 : vector<8x128xf32>
    %211 = math.exp %210 : vector<8x128xf32>
    %212 = vector.broadcast %206 : f32 to vector<8x128xf32>
    %213 = arith.mulf %212, %211 : vector<8x128xf32>
    %c87 = arith.constant 87 : index
    %214 = memref.load %arg2[%c87] : memref<104xf32, #tpu.memory_space<smem>>
    %215 = arith.mulf %205, %205 : vector<8x128xf32>
    %c55 = arith.constant 55 : index
    %216 = memref.load %arg2[%c55] : memref<104xf32, #tpu.memory_space<smem>>
    %217 = vector.broadcast %216 : f32 to vector<8x128xf32>
    %218 = arith.mulf %215, %217 : vector<8x128xf32>
    %219 = math.exp %218 : vector<8x128xf32>
    %220 = vector.broadcast %214 : f32 to vector<8x128xf32>
    %221 = arith.mulf %220, %219 : vector<8x128xf32>
    %222 = arith.addf %198, %213 : vector<8x128xf32>
    %223 = arith.addf %199, %221 : vector<8x128xf32>
    %224 = arith.mulf %222, %123 : vector<8x128xf32>
    %225 = arith.mulf %223, %125 : vector<8x128xf32>
    %226 = arith.subf %224, %225 : vector<8x128xf32>
    %227 = arith.addf %226, %123 : vector<8x128xf32>
    %228 = arith.mulf %222, %125 : vector<8x128xf32>
    %229 = arith.mulf %223, %123 : vector<8x128xf32>
    %230 = arith.addf %228, %229 : vector<8x128xf32>
    %231 = arith.addf %230, %125 : vector<8x128xf32>
    %c97 = arith.constant 97 : index
    %232 = memref.load %arg2[%c97] : memref<104xf32, #tpu.memory_space<smem>>
    %c101 = arith.constant 101 : index
    %233 = memref.load %arg2[%c101] : memref<104xf32, #tpu.memory_space<smem>>
    %234 = vector.broadcast %232 : f32 to vector<8x128xf32>
    %235 = arith.mulf %234, %227 : vector<8x128xf32>
    %236 = vector.broadcast %233 : f32 to vector<8x128xf32>
    %237 = arith.mulf %236, %231 : vector<8x128xf32>
    %238 = arith.subf %235, %237 : vector<8x128xf32>
    %239 = vector.broadcast %232 : f32 to vector<8x128xf32>
    %240 = arith.mulf %239, %231 : vector<8x128xf32>
    %241 = vector.broadcast %233 : f32 to vector<8x128xf32>
    %242 = arith.mulf %241, %227 : vector<8x128xf32>
    %243 = arith.addf %240, %242 : vector<8x128xf32>
    %244 = arith.addf %116, %238 : vector<8x128xf32>
    %245 = arith.addf %121, %243 : vector<8x128xf32>
    %c2_12 = arith.constant 2 : index
    %c0_13 = arith.constant 0 : index
    %c0_14 = arith.constant 0 : index
    %246 = vector.load %arg1[%c2_12, %c0_13, %c0_14] : memref<8x8x128xf32, #tpu.memory_space<vmem>>, vector<1x8x128xf32>
    %247 = vector.shape_cast %246 : vector<1x8x128xf32> to vector<8x128xf32>
    %c6_15 = arith.constant 6 : index
    %c0_16 = arith.constant 0 : index
    %c0_17 = arith.constant 0 : index
    %248 = vector.load %arg1[%c6_15, %c0_16, %c0_17] : memref<8x8x128xf32, #tpu.memory_space<vmem>>, vector<1x8x128xf32>
    %249 = vector.shape_cast %248 : vector<1x8x128xf32> to vector<8x128xf32>
    %250 = arith.mulf %247, %247 : vector<8x128xf32>
    %251 = arith.mulf %249, %249 : vector<8x128xf32>
    %252 = arith.addf %250, %251 : vector<8x128xf32>
    %253 = math.sqrt %252 : vector<8x128xf32>
    %c8 = arith.constant 8 : index
    %254 = memref.load %arg2[%c8] : memref<104xf32, #tpu.memory_space<smem>>
    %255 = vector.broadcast %254 : f32 to vector<8x128xf32>
    %256 = arith.subf %253, %255 : vector<8x128xf32>
    %c24 = arith.constant 24 : index
    %257 = memref.load %arg2[%c24] : memref<104xf32, #tpu.memory_space<smem>>
    %258 = vector.broadcast %257 : f32 to vector<8x128xf32>
    %259 = arith.subf %253, %258 : vector<8x128xf32>
    %c72 = arith.constant 72 : index
    %260 = memref.load %arg2[%c72] : memref<104xf32, #tpu.memory_space<smem>>
    %261 = arith.mulf %256, %256 : vector<8x128xf32>
    %c40 = arith.constant 40 : index
    %262 = memref.load %arg2[%c40] : memref<104xf32, #tpu.memory_space<smem>>
    %263 = vector.broadcast %262 : f32 to vector<8x128xf32>
    %264 = arith.mulf %261, %263 : vector<8x128xf32>
    %265 = math.exp %264 : vector<8x128xf32>
    %266 = vector.broadcast %260 : f32 to vector<8x128xf32>
    %267 = arith.mulf %266, %265 : vector<8x128xf32>
    %c88 = arith.constant 88 : index
    %268 = memref.load %arg2[%c88] : memref<104xf32, #tpu.memory_space<smem>>
    %269 = arith.mulf %259, %259 : vector<8x128xf32>
    %c56 = arith.constant 56 : index
    %270 = memref.load %arg2[%c56] : memref<104xf32, #tpu.memory_space<smem>>
    %271 = vector.broadcast %270 : f32 to vector<8x128xf32>
    %272 = arith.mulf %269, %271 : vector<8x128xf32>
    %273 = math.exp %272 : vector<8x128xf32>
    %274 = vector.broadcast %268 : f32 to vector<8x128xf32>
    %275 = arith.mulf %274, %273 : vector<8x128xf32>
    %c9 = arith.constant 9 : index
    %276 = memref.load %arg2[%c9] : memref<104xf32, #tpu.memory_space<smem>>
    %277 = vector.broadcast %276 : f32 to vector<8x128xf32>
    %278 = arith.subf %253, %277 : vector<8x128xf32>
    %c25 = arith.constant 25 : index
    %279 = memref.load %arg2[%c25] : memref<104xf32, #tpu.memory_space<smem>>
    %280 = vector.broadcast %279 : f32 to vector<8x128xf32>
    %281 = arith.subf %253, %280 : vector<8x128xf32>
    %c73 = arith.constant 73 : index
    %282 = memref.load %arg2[%c73] : memref<104xf32, #tpu.memory_space<smem>>
    %283 = arith.mulf %278, %278 : vector<8x128xf32>
    %c41 = arith.constant 41 : index
    %284 = memref.load %arg2[%c41] : memref<104xf32, #tpu.memory_space<smem>>
    %285 = vector.broadcast %284 : f32 to vector<8x128xf32>
    %286 = arith.mulf %283, %285 : vector<8x128xf32>
    %287 = math.exp %286 : vector<8x128xf32>
    %288 = vector.broadcast %282 : f32 to vector<8x128xf32>
    %289 = arith.mulf %288, %287 : vector<8x128xf32>
    %c89 = arith.constant 89 : index
    %290 = memref.load %arg2[%c89] : memref<104xf32, #tpu.memory_space<smem>>
    %291 = arith.mulf %281, %281 : vector<8x128xf32>
    %c57 = arith.constant 57 : index
    %292 = memref.load %arg2[%c57] : memref<104xf32, #tpu.memory_space<smem>>
    %293 = vector.broadcast %292 : f32 to vector<8x128xf32>
    %294 = arith.mulf %291, %293 : vector<8x128xf32>
    %295 = math.exp %294 : vector<8x128xf32>
    %296 = vector.broadcast %290 : f32 to vector<8x128xf32>
    %297 = arith.mulf %296, %295 : vector<8x128xf32>
    %298 = arith.addf %267, %289 : vector<8x128xf32>
    %299 = arith.addf %275, %297 : vector<8x128xf32>
    %c10 = arith.constant 10 : index
    %300 = memref.load %arg2[%c10] : memref<104xf32, #tpu.memory_space<smem>>
    %301 = vector.broadcast %300 : f32 to vector<8x128xf32>
    %302 = arith.subf %253, %301 : vector<8x128xf32>
    %c26 = arith.constant 26 : index
    %303 = memref.load %arg2[%c26] : memref<104xf32, #tpu.memory_space<smem>>
    %304 = vector.broadcast %303 : f32 to vector<8x128xf32>
    %305 = arith.subf %253, %304 : vector<8x128xf32>
    %c74 = arith.constant 74 : index
    %306 = memref.load %arg2[%c74] : memref<104xf32, #tpu.memory_space<smem>>
    %307 = arith.mulf %302, %302 : vector<8x128xf32>
    %c42 = arith.constant 42 : index
    %308 = memref.load %arg2[%c42] : memref<104xf32, #tpu.memory_space<smem>>
    %309 = vector.broadcast %308 : f32 to vector<8x128xf32>
    %310 = arith.mulf %307, %309 : vector<8x128xf32>
    %311 = math.exp %310 : vector<8x128xf32>
    %312 = vector.broadcast %306 : f32 to vector<8x128xf32>
    %313 = arith.mulf %312, %311 : vector<8x128xf32>
    %c90 = arith.constant 90 : index
    %314 = memref.load %arg2[%c90] : memref<104xf32, #tpu.memory_space<smem>>
    %315 = arith.mulf %305, %305 : vector<8x128xf32>
    %c58 = arith.constant 58 : index
    %316 = memref.load %arg2[%c58] : memref<104xf32, #tpu.memory_space<smem>>
    %317 = vector.broadcast %316 : f32 to vector<8x128xf32>
    %318 = arith.mulf %315, %317 : vector<8x128xf32>
    %319 = math.exp %318 : vector<8x128xf32>
    %320 = vector.broadcast %314 : f32 to vector<8x128xf32>
    %321 = arith.mulf %320, %319 : vector<8x128xf32>
    %322 = arith.addf %298, %313 : vector<8x128xf32>
    %323 = arith.addf %299, %321 : vector<8x128xf32>
    %c11 = arith.constant 11 : index
    %324 = memref.load %arg2[%c11] : memref<104xf32, #tpu.memory_space<smem>>
    %325 = vector.broadcast %324 : f32 to vector<8x128xf32>
    %326 = arith.subf %253, %325 : vector<8x128xf32>
    %c27 = arith.constant 27 : index
    %327 = memref.load %arg2[%c27] : memref<104xf32, #tpu.memory_space<smem>>
    %328 = vector.broadcast %327 : f32 to vector<8x128xf32>
    %329 = arith.subf %253, %328 : vector<8x128xf32>
    %c75 = arith.constant 75 : index
    %330 = memref.load %arg2[%c75] : memref<104xf32, #tpu.memory_space<smem>>
    %331 = arith.mulf %326, %326 : vector<8x128xf32>
    %c43 = arith.constant 43 : index
    %332 = memref.load %arg2[%c43] : memref<104xf32, #tpu.memory_space<smem>>
    %333 = vector.broadcast %332 : f32 to vector<8x128xf32>
    %334 = arith.mulf %331, %333 : vector<8x128xf32>
    %335 = math.exp %334 : vector<8x128xf32>
    %336 = vector.broadcast %330 : f32 to vector<8x128xf32>
    %337 = arith.mulf %336, %335 : vector<8x128xf32>
    %c91 = arith.constant 91 : index
    %338 = memref.load %arg2[%c91] : memref<104xf32, #tpu.memory_space<smem>>
    %339 = arith.mulf %329, %329 : vector<8x128xf32>
    %c59 = arith.constant 59 : index
    %340 = memref.load %arg2[%c59] : memref<104xf32, #tpu.memory_space<smem>>
    %341 = vector.broadcast %340 : f32 to vector<8x128xf32>
    %342 = arith.mulf %339, %341 : vector<8x128xf32>
    %343 = math.exp %342 : vector<8x128xf32>
    %344 = vector.broadcast %338 : f32 to vector<8x128xf32>
    %345 = arith.mulf %344, %343 : vector<8x128xf32>
    %346 = arith.addf %322, %337 : vector<8x128xf32>
    %347 = arith.addf %323, %345 : vector<8x128xf32>
    %348 = arith.mulf %346, %247 : vector<8x128xf32>
    %349 = arith.mulf %347, %249 : vector<8x128xf32>
    %350 = arith.subf %348, %349 : vector<8x128xf32>
    %351 = arith.addf %350, %247 : vector<8x128xf32>
    %352 = arith.mulf %346, %249 : vector<8x128xf32>
    %353 = arith.mulf %347, %247 : vector<8x128xf32>
    %354 = arith.addf %352, %353 : vector<8x128xf32>
    %355 = arith.addf %354, %249 : vector<8x128xf32>
    %c98 = arith.constant 98 : index
    %356 = memref.load %arg2[%c98] : memref<104xf32, #tpu.memory_space<smem>>
    %c102 = arith.constant 102 : index
    %357 = memref.load %arg2[%c102] : memref<104xf32, #tpu.memory_space<smem>>
    %358 = vector.broadcast %356 : f32 to vector<8x128xf32>
    %359 = arith.mulf %358, %351 : vector<8x128xf32>
    %360 = vector.broadcast %357 : f32 to vector<8x128xf32>
    %361 = arith.mulf %360, %355 : vector<8x128xf32>
    %362 = arith.subf %359, %361 : vector<8x128xf32>
    %363 = vector.broadcast %356 : f32 to vector<8x128xf32>
    %364 = arith.mulf %363, %355 : vector<8x128xf32>
    %365 = vector.broadcast %357 : f32 to vector<8x128xf32>
    %366 = arith.mulf %365, %351 : vector<8x128xf32>
    %367 = arith.addf %364, %366 : vector<8x128xf32>
    %368 = arith.addf %244, %362 : vector<8x128xf32>
    %369 = arith.addf %245, %367 : vector<8x128xf32>
    %c3_18 = arith.constant 3 : index
    %c0_19 = arith.constant 0 : index
    %c0_20 = arith.constant 0 : index
    %370 = vector.load %arg1[%c3_18, %c0_19, %c0_20] : memref<8x8x128xf32, #tpu.memory_space<vmem>>, vector<1x8x128xf32>
    %371 = vector.shape_cast %370 : vector<1x8x128xf32> to vector<8x128xf32>
    %c7_21 = arith.constant 7 : index
    %c0_22 = arith.constant 0 : index
    %c0_23 = arith.constant 0 : index
    %372 = vector.load %arg1[%c7_21, %c0_22, %c0_23] : memref<8x8x128xf32, #tpu.memory_space<vmem>>, vector<1x8x128xf32>
    %373 = vector.shape_cast %372 : vector<1x8x128xf32> to vector<8x128xf32>
    %374 = arith.mulf %371, %371 : vector<8x128xf32>
    %375 = arith.mulf %373, %373 : vector<8x128xf32>
    %376 = arith.addf %374, %375 : vector<8x128xf32>
    %377 = math.sqrt %376 : vector<8x128xf32>
    %c12 = arith.constant 12 : index
    %378 = memref.load %arg2[%c12] : memref<104xf32, #tpu.memory_space<smem>>
    %379 = vector.broadcast %378 : f32 to vector<8x128xf32>
    %380 = arith.subf %377, %379 : vector<8x128xf32>
    %c28 = arith.constant 28 : index
    %381 = memref.load %arg2[%c28] : memref<104xf32, #tpu.memory_space<smem>>
    %382 = vector.broadcast %381 : f32 to vector<8x128xf32>
    %383 = arith.subf %377, %382 : vector<8x128xf32>
    %c76 = arith.constant 76 : index
    %384 = memref.load %arg2[%c76] : memref<104xf32, #tpu.memory_space<smem>>
    %385 = arith.mulf %380, %380 : vector<8x128xf32>
    %c44 = arith.constant 44 : index
    %386 = memref.load %arg2[%c44] : memref<104xf32, #tpu.memory_space<smem>>
    %387 = vector.broadcast %386 : f32 to vector<8x128xf32>
    %388 = arith.mulf %385, %387 : vector<8x128xf32>
    %389 = math.exp %388 : vector<8x128xf32>
    %390 = vector.broadcast %384 : f32 to vector<8x128xf32>
    %391 = arith.mulf %390, %389 : vector<8x128xf32>
    %c92 = arith.constant 92 : index
    %392 = memref.load %arg2[%c92] : memref<104xf32, #tpu.memory_space<smem>>
    %393 = arith.mulf %383, %383 : vector<8x128xf32>
    %c60 = arith.constant 60 : index
    %394 = memref.load %arg2[%c60] : memref<104xf32, #tpu.memory_space<smem>>
    %395 = vector.broadcast %394 : f32 to vector<8x128xf32>
    %396 = arith.mulf %393, %395 : vector<8x128xf32>
    %397 = math.exp %396 : vector<8x128xf32>
    %398 = vector.broadcast %392 : f32 to vector<8x128xf32>
    %399 = arith.mulf %398, %397 : vector<8x128xf32>
    %c13 = arith.constant 13 : index
    %400 = memref.load %arg2[%c13] : memref<104xf32, #tpu.memory_space<smem>>
    %401 = vector.broadcast %400 : f32 to vector<8x128xf32>
    %402 = arith.subf %377, %401 : vector<8x128xf32>
    %c29 = arith.constant 29 : index
    %403 = memref.load %arg2[%c29] : memref<104xf32, #tpu.memory_space<smem>>
    %404 = vector.broadcast %403 : f32 to vector<8x128xf32>
    %405 = arith.subf %377, %404 : vector<8x128xf32>
    %c77 = arith.constant 77 : index
    %406 = memref.load %arg2[%c77] : memref<104xf32, #tpu.memory_space<smem>>
    %407 = arith.mulf %402, %402 : vector<8x128xf32>
    %c45 = arith.constant 45 : index
    %408 = memref.load %arg2[%c45] : memref<104xf32, #tpu.memory_space<smem>>
    %409 = vector.broadcast %408 : f32 to vector<8x128xf32>
    %410 = arith.mulf %407, %409 : vector<8x128xf32>
    %411 = math.exp %410 : vector<8x128xf32>
    %412 = vector.broadcast %406 : f32 to vector<8x128xf32>
    %413 = arith.mulf %412, %411 : vector<8x128xf32>
    %c93 = arith.constant 93 : index
    %414 = memref.load %arg2[%c93] : memref<104xf32, #tpu.memory_space<smem>>
    %415 = arith.mulf %405, %405 : vector<8x128xf32>
    %c61 = arith.constant 61 : index
    %416 = memref.load %arg2[%c61] : memref<104xf32, #tpu.memory_space<smem>>
    %417 = vector.broadcast %416 : f32 to vector<8x128xf32>
    %418 = arith.mulf %415, %417 : vector<8x128xf32>
    %419 = math.exp %418 : vector<8x128xf32>
    %420 = vector.broadcast %414 : f32 to vector<8x128xf32>
    %421 = arith.mulf %420, %419 : vector<8x128xf32>
    %422 = arith.addf %391, %413 : vector<8x128xf32>
    %423 = arith.addf %399, %421 : vector<8x128xf32>
    %c14 = arith.constant 14 : index
    %424 = memref.load %arg2[%c14] : memref<104xf32, #tpu.memory_space<smem>>
    %425 = vector.broadcast %424 : f32 to vector<8x128xf32>
    %426 = arith.subf %377, %425 : vector<8x128xf32>
    %c30 = arith.constant 30 : index
    %427 = memref.load %arg2[%c30] : memref<104xf32, #tpu.memory_space<smem>>
    %428 = vector.broadcast %427 : f32 to vector<8x128xf32>
    %429 = arith.subf %377, %428 : vector<8x128xf32>
    %c78 = arith.constant 78 : index
    %430 = memref.load %arg2[%c78] : memref<104xf32, #tpu.memory_space<smem>>
    %431 = arith.mulf %426, %426 : vector<8x128xf32>
    %c46 = arith.constant 46 : index
    %432 = memref.load %arg2[%c46] : memref<104xf32, #tpu.memory_space<smem>>
    %433 = vector.broadcast %432 : f32 to vector<8x128xf32>
    %434 = arith.mulf %431, %433 : vector<8x128xf32>
    %435 = math.exp %434 : vector<8x128xf32>
    %436 = vector.broadcast %430 : f32 to vector<8x128xf32>
    %437 = arith.mulf %436, %435 : vector<8x128xf32>
    %c94 = arith.constant 94 : index
    %438 = memref.load %arg2[%c94] : memref<104xf32, #tpu.memory_space<smem>>
    %439 = arith.mulf %429, %429 : vector<8x128xf32>
    %c62 = arith.constant 62 : index
    %440 = memref.load %arg2[%c62] : memref<104xf32, #tpu.memory_space<smem>>
    %441 = vector.broadcast %440 : f32 to vector<8x128xf32>
    %442 = arith.mulf %439, %441 : vector<8x128xf32>
    %443 = math.exp %442 : vector<8x128xf32>
    %444 = vector.broadcast %438 : f32 to vector<8x128xf32>
    %445 = arith.mulf %444, %443 : vector<8x128xf32>
    %446 = arith.addf %422, %437 : vector<8x128xf32>
    %447 = arith.addf %423, %445 : vector<8x128xf32>
    %c15 = arith.constant 15 : index
    %448 = memref.load %arg2[%c15] : memref<104xf32, #tpu.memory_space<smem>>
    %449 = vector.broadcast %448 : f32 to vector<8x128xf32>
    %450 = arith.subf %377, %449 : vector<8x128xf32>
    %c31 = arith.constant 31 : index
    %451 = memref.load %arg2[%c31] : memref<104xf32, #tpu.memory_space<smem>>
    %452 = vector.broadcast %451 : f32 to vector<8x128xf32>
    %453 = arith.subf %377, %452 : vector<8x128xf32>
    %c79 = arith.constant 79 : index
    %454 = memref.load %arg2[%c79] : memref<104xf32, #tpu.memory_space<smem>>
    %455 = arith.mulf %450, %450 : vector<8x128xf32>
    %c47 = arith.constant 47 : index
    %456 = memref.load %arg2[%c47] : memref<104xf32, #tpu.memory_space<smem>>
    %457 = vector.broadcast %456 : f32 to vector<8x128xf32>
    %458 = arith.mulf %455, %457 : vector<8x128xf32>
    %459 = math.exp %458 : vector<8x128xf32>
    %460 = vector.broadcast %454 : f32 to vector<8x128xf32>
    %461 = arith.mulf %460, %459 : vector<8x128xf32>
    %c95 = arith.constant 95 : index
    %462 = memref.load %arg2[%c95] : memref<104xf32, #tpu.memory_space<smem>>
    %463 = arith.mulf %453, %453 : vector<8x128xf32>
    %c63 = arith.constant 63 : index
    %464 = memref.load %arg2[%c63] : memref<104xf32, #tpu.memory_space<smem>>
    %465 = vector.broadcast %464 : f32 to vector<8x128xf32>
    %466 = arith.mulf %463, %465 : vector<8x128xf32>
    %467 = math.exp %466 : vector<8x128xf32>
    %468 = vector.broadcast %462 : f32 to vector<8x128xf32>
    %469 = arith.mulf %468, %467 : vector<8x128xf32>
    %470 = arith.addf %446, %461 : vector<8x128xf32>
    %471 = arith.addf %447, %469 : vector<8x128xf32>
    %472 = arith.mulf %470, %371 : vector<8x128xf32>
    %473 = arith.mulf %471, %373 : vector<8x128xf32>
    %474 = arith.subf %472, %473 : vector<8x128xf32>
    %475 = arith.addf %474, %371 : vector<8x128xf32>
    %476 = arith.mulf %470, %373 : vector<8x128xf32>
    %477 = arith.mulf %471, %371 : vector<8x128xf32>
    %478 = arith.addf %476, %477 : vector<8x128xf32>
    %479 = arith.addf %478, %373 : vector<8x128xf32>
    %c99 = arith.constant 99 : index
    %480 = memref.load %arg2[%c99] : memref<104xf32, #tpu.memory_space<smem>>
    %c103 = arith.constant 103 : index
    %481 = memref.load %arg2[%c103] : memref<104xf32, #tpu.memory_space<smem>>
    %482 = vector.broadcast %480 : f32 to vector<8x128xf32>
    %483 = arith.mulf %482, %475 : vector<8x128xf32>
    %484 = vector.broadcast %481 : f32 to vector<8x128xf32>
    %485 = arith.mulf %484, %479 : vector<8x128xf32>
    %486 = arith.subf %483, %485 : vector<8x128xf32>
    %487 = vector.broadcast %480 : f32 to vector<8x128xf32>
    %488 = arith.mulf %487, %479 : vector<8x128xf32>
    %489 = vector.broadcast %481 : f32 to vector<8x128xf32>
    %490 = arith.mulf %489, %475 : vector<8x128xf32>
    %491 = arith.addf %488, %490 : vector<8x128xf32>
    %492 = arith.addf %368, %486 : vector<8x128xf32>
    %493 = arith.addf %369, %491 : vector<8x128xf32>
    %c0_24 = arith.constant 0 : index
    %c0_25 = arith.constant 0 : index
    %c0_26 = arith.constant 0 : index
    %494 = vector.load %arg3[%c0_24, %c0_25, %c0_26] : memref<2x8x128xf32, #tpu.memory_space<vmem>>, vector<1x8x128xf32>
    %495 = vector.shape_cast %494 : vector<1x8x128xf32> to vector<8x128xf32>
    %496 = vector.shape_cast %492 : vector<8x128xf32> to vector<1x8x128xf32>
    tpu.vector_store %arg3[%c0_24, %c0_25, %c0_26], %496 {strides = array<i32>} : memref<2x8x128xf32, #tpu.memory_space<vmem>>, vector<1x8x128xf32>,
    %c1_27 = arith.constant 1 : index
    %c0_28 = arith.constant 0 : index
    %c0_29 = arith.constant 0 : index
    %497 = vector.load %arg3[%c1_27, %c0_28, %c0_29] : memref<2x8x128xf32, #tpu.memory_space<vmem>>, vector<1x8x128xf32>
    %498 = vector.shape_cast %497 : vector<1x8x128xf32> to vector<8x128xf32>
    %499 = vector.shape_cast %493 : vector<8x128xf32> to vector<1x8x128xf32>
    tpu.vector_store %arg3[%c1_27, %c0_28, %c0_29], %499 {strides = array<i32>} : memref<2x8x128xf32, #tpu.memory_space<vmem>>, vector<1x8x128xf32>,
    return
  }
  func.func @transform_0(%arg0: i32) -> (i32, i32, i32) {
    %c0_i32 = arith.constant 0 : i32
    %c0_i32_0 = arith.constant 0 : i32
    %c0_i32_1 = arith.constant 0 : i32
    return %c0_i32, %arg0, %c0_i32_0 : i32, i32, i32
  }
  func.func @transform_1(%arg0: i32) -> i32 {
    %c0_i32 = arith.constant 0 : i32
    %c0_i32_0 = arith.constant 0 : i32
    return %c0_i32 : i32
  }
  func.func @transform_2(%arg0: i32) -> (i32, i32, i32) {
    %c0_i32 = arith.constant 0 : i32
    %c0_i32_0 = arith.constant 0 : i32
    %c0_i32_1 = arith.constant 0 : i32
    return %c0_i32, %arg0, %c0_i32_0 : i32, i32, i32
  }
}

</mosaic_0001>

<llo_original>
// kernel: custom-call
$region0: #{custom-call}
  %s0 = inlined_call_operand.hbm [shape: c64[2048], index: 0, kind: input, shape index: {}]
  %s1 = inlined_call_operand.vmem [shape: f32[2048], index: 1, kind: output, shape index: {}]
  $region1: #{custom-call} parent=0
    #allocation0 [shape = 's32[1]{0}', space=sflag, size = 0x4, scoped, tag = 'scoped memory for custom-call']
    %2 = vsyncpa [#allocation0], 0
    %s3 = sshll.u32 %s1, 4
    %s4 = int_to_ptr.vmem [resolvable:$true] %s3
    %6 = dma.hbm_to_vmem [thread:$0]  %s0, 256, %s4, [#allocation0]
    %7 = dma.done [#allocation0], 256
    %8 = vsyncpa [#allocation0], 1

// kernel: custom-call.1
$region0: #{custom-call.1}
  %s0 = inlined_call_operand.hbm [shape: c64[2048], index: 0, kind: input, shape index: {}]
  %s1 = inlined_call_operand.vmem [shape: f32[2048], index: 1, kind: output, shape index: {}]
  %s2 = scalar_lea.hbm %s0, 256
  $region1: #{custom-call.1} parent=0
    #allocation0 [shape = 's32[1]{0}', space=sflag, size = 0x4, scoped, tag = 'scoped memory for custom-call.1']
    %3 = vsyncpa [#allocation0], 0
    %s4 = sshll.u32 %s1, 4
    %s5 = int_to_ptr.vmem [resolvable:$true] %s4
    %7 = dma.hbm_to_vmem [thread:$0]  %s2, 256, %s5, [#allocation0]
    %8 = dma.done [#allocation0], 256
    %9 = vsyncpa [#allocation0], 1

// kernel: custom-call.3
$region0: #{custom-call.3}
  %s0 = inlined_call_operand.hbm [shape: c64[4,1,9], index: 0, kind: input, shape index: {}]
  %s1 = inlined_call_operand.vmem [shape: f32[4,1,9], index: 1, kind: output, shape index: {}]
  %s2 = scalar_lea.hbm %s0, 64
  $region1: #{custom-call.3} parent=0
    #allocation0 [shape = 's32[1]{0}', space=sflag, size = 0x4, scoped, tag = 'scoped memory for custom-call.3']
    %3 = vsyncpa [#allocation0], 0
    %s4 = sshll.u32 %s1, 4
    %s5 = int_to_ptr.vmem [resolvable:$true] %s4
    %7 = dma.hbm_to_vmem [thread:$0]  %s2, 64, %s5, [#allocation0]
    %8 = dma.done [#allocation0], 64
    %9 = vsyncpa [#allocation0], 1

// kernel: custom-call.2
$region0: #{custom-call.2}
  %s0 = inlined_call_operand.hbm [shape: c64[4,1,9], index: 0, kind: input, shape index: {}]
  %s1 = inlined_call_operand.vmem [shape: f32[4,1,9], index: 1, kind: output, shape index: {}]
  $region1: #{custom-call.2} parent=0
    #allocation0 [shape = 's32[1]{0}', space=sflag, size = 0x4, scoped, tag = 'scoped memory for custom-call.2']
    %2 = vsyncpa [#allocation0], 0
    %s3 = sshll.u32 %s1, 4
    %s4 = int_to_ptr.vmem [resolvable:$true] %s3
    %6 = dma.hbm_to_vmem [thread:$0]  %s0, 64, %s4, [#allocation0]
    %7 = dma.done [#allocation0], 64
    %8 = vsyncpa [#allocation0], 1

// kernel: neg.0
$region0: #{neg.0}
  #allocation0 [shape = 's32[1]{0}', space=sflag, size = 0x4, scoped, tag = 'scoped memory for neg.0']
  %s0 = inlined_call_operand.vmem [shape: f32[4,1,9], index: 0, kind: input, shape index: {}]
  %s1 = inlined_call_operand.vmem [shape: f32[4,1,9], index: 1, kind: output, shape index: {}]
  %v2 = vld [vmem:[%s0] sm:$0xf]
  %3 = xla_tuple %v2
  %4 = xla_tuple %3
  %v5 = vxor.u32 %v2, 2147483648
  %6 = xla_tuple %v5
  %7 = vst [vmem:[%s1] sm:$0xf] %v5

// kernel: custom-call.4
$region0: #{custom-call.4}
  %s0 = inlined_call_operand.hbm [shape: c64[4,1,4], index: 0, kind: input, shape index: {}]
  %s1 = inlined_call_operand.vmem [shape: f32[4,1,4], index: 1, kind: output, shape index: {}]
  $region1: #{custom-call.4} parent=0
    #allocation0 [shape = 's32[1]{0}', space=sflag, size = 0x4, scoped, tag = 'scoped memory for custom-call.4']
    %2 = vsyncpa [#allocation0], 0
    %s3 = sshll.u32 %s1, 4
    %s4 = int_to_ptr.vmem [resolvable:$true] %s3
    %6 = dma.hbm_to_vmem [thread:$0]  %s0, 64, %s4, [#allocation0]
    %7 = dma.done [#allocation0], 64
    %8 = vsyncpa [#allocation0], 1

// kernel: custom-call.5
$region0: #{custom-call.5}
  %s0 = inlined_call_operand.hbm [shape: c64[4,1,4], index: 0, kind: input, shape index: {}]
  %s1 = inlined_call_operand.vmem [shape: f32[4,1,4], index: 1, kind: output, shape index: {}]
  %s2 = scalar_lea.hbm %s0, 64
  $region1: #{custom-call.5} parent=0
    #allocation0 [shape = 's32[1]{0}', space=sflag, size = 0x4, scoped, tag = 'scoped memory for custom-call.5']
    %3 = vsyncpa [#allocation0], 0
    %s4 = sshll.u32 %s1, 4
    %s5 = int_to_ptr.vmem [resolvable:$true] %s4
    %7 = dma.hbm_to_vmem [thread:$0]  %s2, 64, %s5, [#allocation0]
    %8 = dma.done [#allocation0], 64
    %9 = vsyncpa [#allocation0], 1

// kernel: custom-call.8
$region0: #{custom-call.8}
  %s0 = inlined_call_operand.hbm [shape: c64[4,4,1], index: 0, kind: input, shape index: {}]
  %s1 = inlined_call_operand.vmem [shape: f32[4,4,1], index: 1, kind: output, shape index: {}]
  $region1: #{custom-call.8} parent=0
    #allocation0 [shape = 's32[1]{0}', space=sflag, size = 0x4, scoped, tag = 'scoped memory for custom-call.8']
    %2 = vsyncpa [#allocation0], 0
    %s3 = sshll.u32 %s1, 4
    %s4 = int_to_ptr.vmem [resolvable:$true] %s3
    %6 = dma.hbm_to_vmem [thread:$0]  %s0, 64, %s4, [#allocation0]
    %7 = dma.done [#allocation0], 64
    %8 = vsyncpa [#allocation0], 1

// kernel: custom-call.9
$region0: #{custom-call.9}
  %s0 = inlined_call_operand.hbm [shape: c64[4,4,1], index: 0, kind: input, shape index: {}]
  %s1 = inlined_call_operand.vmem [shape: f32[4,4,1], index: 1, kind: output, shape index: {}]
  %s2 = scalar_lea.hbm %s0, 64
  $region1: #{custom-call.9} parent=0
    #allocation0 [shape = 's32[1]{0}', space=sflag, size = 0x4, scoped, tag = 'scoped memory for custom-call.9']
    %3 = vsyncpa [#allocation0], 0
    %s4 = sshll.u32 %s1, 4
    %s5 = int_to_ptr.vmem [resolvable:$true] %s4
    %7 = dma.hbm_to_vmem [thread:$0]  %s2, 64, %s5, [#allocation0]
    %8 = dma.done [#allocation0], 64
    %9 = vsyncpa [#allocation0], 1

// kernel: custom-call.10
$region0: #{custom-call.10}
  %s0 = inlined_call_operand.hbm [shape: c64[1,4,1], index: 0, kind: input, shape index: {}]
  %s1 = inlined_call_operand.vmem [shape: f32[1,4,1], index: 1, kind: output, shape index: {}]
  $region1: #{custom-call.10} parent=0
    #allocation0 [shape = 's32[1]{0}', space=sflag, size = 0x4, scoped, tag = 'scoped memory for custom-call.10']
    %2 = vsyncpa [#allocation0], 0
    %s3 = sshll.u32 %s1, 4
    %s4 = int_to_ptr.vmem [resolvable:$true] %s3
    %6 = dma.hbm_to_vmem [thread:$0]  %s0, 16, %s4, [#allocation0]
    %7 = dma.done [#allocation0], 16
    %8 = vsyncpa [#allocation0], 1

// kernel: custom-call.11
$region0: #{custom-call.11}
  %s0 = inlined_call_operand.hbm [shape: c64[1,4,1], index: 0, kind: input, shape index: {}]
  %s1 = inlined_call_operand.vmem [shape: f32[1,4,1], index: 1, kind: output, shape index: {}]
  %s2 = scalar_lea.hbm %s0, 16
  $region1: #{custom-call.11} parent=0
    #allocation0 [shape = 's32[1]{0}', space=sflag, size = 0x4, scoped, tag = 'scoped memory for custom-call.11']
    %3 = vsyncpa [#allocation0], 0
    %s4 = sshll.u32 %s1, 4
    %s5 = int_to_ptr.vmem [resolvable:$true] %s4
    %7 = dma.hbm_to_vmem [thread:$0]  %s2, 16, %s5, [#allocation0]
    %8 = dma.done [#allocation0], 16
    %9 = vsyncpa [#allocation0], 1

// kernel: custom-call.12
$region0: #{custom-call.12}
  %s0 = inlined_call_operand.vmem [shape: f32[2048], index: 0, kind: input, shape index: {}]
  %s1 = inlined_call_operand.vmem [shape: f32[2048], index: 1, kind: input, shape index: {}]
  %s2 = inlined_call_operand.hbm [shape: c64[2048], index: 2, kind: output, shape index: {}]
  %s3 = scalar_lea.hbm %s2, 256
  $region1: #{custom-call.12} parent=0
    #allocation0 [shape = 's32[1]{0}', space=sflag, size = 0x4, scoped, tag = 'scoped memory for custom-call.12']
    %4 = vsyncpa [#allocation0], 0
    %s5 = sshll.u32 %s0, 4
    %s6 = int_to_ptr.vmem [resolvable:$true] %s5
    %8 = dma.vmem_to_hbm [thread:$0]  %s6, 256, %s2, [#allocation0]
    %9 = dma.done [#allocation0], 256
    %10 = vsyncpa [#allocation0], 1
  $region2: #{custom-call.12} parent=0
    #allocation1 [shape = 's32[1]{0}', space=sflag, size = 0x4, scoped, tag = 'scoped memory for custom-call.12']
    %11 = vsyncpa [#allocation1], 0
    %s12 = sshll.u32 %s1, 4
    %s13 = int_to_ptr.vmem [resolvable:$true] %s12
    %15 = dma.vmem_to_hbm [thread:$0]  %s13, 256, %s3, [#allocation1]
    %16 = dma.done [#allocation1], 256
    %17 = vsyncpa [#allocation1], 1

// kernel: mymodel_forward.1
$region0: #{mymodel_forward.1}
  #allocation0 [shape = 'u32[]', space=smem, size = 0x4, offset = 0x4, fixed_abs, tag = 'smem constant byte address 0x4 - core index']
  #allocation1 [shape = 'u32[144,128]{1,0:T(1,128)}', space=vmem, size = 0x12000, scoped, tag = 'internal scratch']
  %s0 = inlined_call_operand.vmem [shape: f32[8,16,128], index: 0, kind: input, shape index: {}]
  %s1 = inlined_call_operand.vmem [shape: f32[104], index: 1, kind: input, shape index: {}]
  %s2 = inlined_call_operand.vmem [shape: f32[2,16,128], index: 2, kind: output, shape index: {}]
  %s3 = sld [smem:[#allocation0]]
  $region117: #{mymodel_forward.1} parent=0
    _
  %s5 = ssub.s32 1, %s3
  %s6 = scalar_select 0, %s5, %s3
  $region1: #{mymodel_forward.1} parent=0
    #allocation2 [shape = 'u8[65536]{0}', space=vmem, size = 0x10000, scoped, tag = 'input window, operand 0']
    #allocation3 [shape = 'u8[512]{0}', space=smem, size = 0x200, scoped, tag = 'input window, operand 1, single buffered']
    #allocation4 [shape = 's32[2]{0}', space=sflag, size = 0x8, scoped, tag = 'scoped memory for mymodel_forward.1']
    #allocation5 [shape = 'u8[16384]{0}', space=vmem, size = 0x4000, scoped, tag = 'output window, operand 0']
    %7 = vsyncpa [#allocation4], 0
    loop: start=0, step=1, limit=4
    $region2: #{mymodel_forward.1} parent=1 // loop_pre_header
      _
    $region3: #{mymodel_forward.1} parent=1 // loop_header
      %s9 = sphi 0, %s13
      %p10 = scmp.ge.s32.totalorder %s9, 4
      %s19 = sphi 0, %s21
      %s22 = sphi 0, %s19
      %s23 = sphi 0, %s22
      %s39 = sphi 0, %s23
      %s43 = sphi 0, %s43
      %s45 = sphi 0, %s43
      %s46 = sphi 0, %s45
      %s60 = sphi 0, %s46
      %s66 = sphi 0, %s68
      %s69 = sphi 0, %s66
      %s70 = sphi 0, %s69
      %s86 = sphi 0, %s70
    $region4: #{mymodel_forward.1} parent=1 // loop_header_branch
      %12 = sbr.rel (%p10) target = $region8
    $region5: #{mymodel_forward.1} parent=1 // loop_body
      %s14 = ssub.s32 %s9, 1
      %s15 = ssub.s32 %s9, 2
      %s16 = sadd.s32 %s9, 1
      %s17 = ssub.s32 %s9, %s16
      %p18 = scmp.eq.s32.totalorder %s17, 0
      %s20 = sadd.s32 %s19, 1
      %s21 = scalar_select %p18, %s19, %s20
      %p24 = pneg %p18
      %p25 = scmp.eq.s32.totalorder %s9, 1
      %p26 = por %p24, %p25
      %p27 = scmp.ne.s32.totalorder %s19, %s22
      %p28 = scmp.eq.s32.totalorder %s9, 0
      %p29 = por %p27, %p28
      %p30 = scmp.ne.s32.totalorder %s19, %s22
      %p31 = scmp.eq.s32.totalorder %s14, 1
      %p32 = por %p30, %p31
      %p33 = scmp.ne.s32.totalorder %s22, %s23
      %p34 = scmp.eq.s32.totalorder %s14, 0
      %p35 = por %p33, %p34
      %p36 = scmp.ne.s32.totalorder %s22, %s23
      %p37 = scmp.eq.s32.totalorder %s15, 1
      %p38 = por %p36, %p37
      %p40 = scmp.ne.s32.totalorder %s23, %s39
      %p41 = scmp.eq.s32.totalorder %s15, 0
      %p42 = por %p40, %p41
      %s44 = sadd.s32 %s43, 1
      %p47 = scmp.eq.s32.totalorder %s9, 1
      %p48 = scmp.ne.s32.totalorder %s43, %s45
      %p49 = scmp.eq.s32.totalorder %s9, 0
      %p50 = por %p48, %p49
      %p51 = scmp.ne.s32.totalorder %s43, %s45
      %p52 = scmp.eq.s32.totalorder %s14, 1
      %p53 = por %p51, %p52
      %p54 = scmp.ne.s32.totalorder %s45, %s46
      %p55 = scmp.eq.s32.totalorder %s14, 0
      %p56 = por %p54, %p55
      %p57 = scmp.ne.s32.totalorder %s45, %s46
      %p58 = scmp.eq.s32.totalorder %s15, 1
      %p59 = por %p57, %p58
      %p61 = scmp.ne.s32.totalorder %s46, %s60
      %p62 = scmp.eq.s32.totalorder %s15, 0
      %p63 = por %p61, %p62
      %s64 = ssub.s32 %s9, %s16
      %p65 = scmp.eq.s32.totalorder %s64, 0
      %s67 = sadd.s32 %s66, 1
      %s68 = scalar_select %p65, %s66, %s67
      %p71 = pneg %p65
      %p72 = scmp.eq.s32.totalorder %s9, 1
      %p73 = por %p71, %p72
      %p74 = scmp.ne.s32.totalorder %s66, %s69
      %p75 = scmp.eq.s32.totalorder %s9, 0
      %p76 = por %p74, %p75
      %p77 = scmp.ne.s32.totalorder %s66, %s69
      %p78 = scmp.eq.s32.totalorder %s14, 1
      %p79 = por %p77, %p78
      %p80 = scmp.ne.s32.totalorder %s69, %s70
      %p81 = scmp.eq.s32.totalorder %s14, 0
      %p82 = por %p80, %p81
      %p83 = scmp.ne.s32.totalorder %s69, %s70
      %p84 = scmp.eq.s32.totalorder %s15, 1
      %p85 = por %p83, %p84
      %p87 = scmp.ne.s32.totalorder %s70, %s86
      %p88 = scmp.eq.s32.totalorder %s15, 0
      %p89 = por %p87, %p88
      %p90 = scmp.le.s32.totalorder 1, %s9
      %p91 = scmp.lt.s32.totalorder %s9, 3
      %p92 = pnand %p90, %p91
      %p93 = pneg %p92
      // Predicated region
      $region9: #{mymodel_forward.1} parent=5 // pred_check
        _
      $region10: #{mymodel_forward.1} parent=5 // pred_check_branch
        %95 = sbr.rel (%p92) target = $region12
      $region11: #{mymodel_forward.1} parent=5 // pred_region
        %s96 = ssub.s32 %s9, 1
        // Predicated region
        $region13: #{mymodel_forward.1} parent=11 // pred_check
          %p97 = pneg %p56
        $region14: #{mymodel_forward.1} parent=11 // pred_check_branch
          %99 = sbr.rel (%p97) target = $region16
        $region15: #{mymodel_forward.1} parent=11 // pred_region
          %s101 = ssub.s32 16, 16
          %102 = vsyncadd [#allocation4], %s101
          %s104 = sshll.u32 %s1, 4
          %s105 = int_to_ptr.vmem [resolvable:$true] %s104
          %107 = dma.vmem_to_smem %s105, 16, [#allocation3], [#allocation4]
        $region16: #{mymodel_forward.1} parent=11 // pred_fallthru
          _
      $region12: #{mymodel_forward.1} parent=5 // pred_fallthru
        _
      %p108 = scmp.lt.s32.totalorder %s9, 2
      // Predicated region
      $region17: #{mymodel_forward.1} parent=5 // pred_check
        %p109 = pneg %p108
      $region18: #{mymodel_forward.1} parent=5 // pred_check_branch
        %111 = sbr.rel (%p109) target = $region20
      $region19: #{mymodel_forward.1} parent=5 // pred_region
        // Predicated region
        $region21: #{mymodel_forward.1} parent=19 // pred_check
          %p112 = pneg %p29
        $region22: #{mymodel_forward.1} parent=19 // pred_check_branch
          %114 = sbr.rel (%p112) target = $region24
        $region23: #{mymodel_forward.1} parent=19 // pred_region
          %s115 = sand.u32 %s19, 1
          %s116 = sand.u32 %s19, 1
          %s117 = smul.addr %s116, 64
          %s118 = scalar_lea.vmem [#allocation2], %s117
          %s119 = smul.addr %s9, 8
          %s120 = scalar_lea.vmem %s0, %s119
          // Predicated region
          $region25: #{mymodel_forward.1} parent=23 // pred_check
            _
          $region26: #{mymodel_forward.1} parent=23 // pred_check_branch
            %122 = sbr.rel (0) target = $region28
          $region27: #{mymodel_forward.1} parent=23 // pred_region
            // Predicated region
            $region29: #{mymodel_forward.1} parent=27 // pred_check
              _
            $region30: #{mymodel_forward.1} parent=27 // pred_check_branch
              %124 = sbr.rel (0) target = $region32
            $region31: #{mymodel_forward.1} parent=27 // pred_region
              // Predicated region
              $region44: #{mymodel_forward.1} parent=31 // pred_check
                _
              $region45: #{mymodel_forward.1} parent=31 // pred_check_branch
                %153 = sbr.rel (0) target = $region47
              $region46: #{mymodel_forward.1} parent=31 // pred_region
                loop: start=0, step=1, limit=1
                $region48: #{mymodel_forward.1} parent=46 // loop_pre_header
                  _
                $region49: #{mymodel_forward.1} parent=46 // loop_header
                  %s155 = sphi 0, %s159
                  %p156 = scmp.ge.s32.totalorder %s155, 1
                  %s160 = sphi %s120, %s120
                  %s161 = sphi %s118, %s118
                $region50: #{mymodel_forward.1} parent=46 // loop_header_branch
                  %158 = sbr.rel (%p156) target = $region54
                $region51: #{mymodel_forward.1} parent=46 // loop_body
                  %v162 = vld [vmem:[%s160] sm:$0xff]
                  %163 = vst [vmem:[%s161] sm:$0xff] %v162
                  %v164 = vld [vmem:[%s160 + $0x10] sm:$0xff]
                  %165 = vst [vmem:[%s161 + $0x8] sm:$0xff] %v164
                  %v166 = vld [vmem:[%s160 + $0x20] sm:$0xff]
                  %167 = vst [vmem:[%s161 + $0x10] sm:$0xff] %v166
                  %v168 = vld [vmem:[%s160 + $0x30] sm:$0xff]
                  %169 = vst [vmem:[%s161 + $0x18] sm:$0xff] %v168
                  %v170 = vld [vmem:[%s160 + $0x40] sm:$0xff]
                  %171 = vst [vmem:[%s161 + $0x20] sm:$0xff] %v170
                  %v172 = vld [vmem:[%s160 + $0x50] sm:$0xff]
                  %173 = vst [vmem:[%s161 + $0x28] sm:$0xff] %v172
                  %v174 = vld [vmem:[%s160 + $0x60] sm:$0xff]
                  %175 = vst [vmem:[%s161 + $0x30] sm:$0xff] %v174
                  %v176 = vld [vmem:[%s160 + $0x70] sm:$0xff]
                  %177 = vst [vmem:[%s161 + $0x38] sm:$0xff] %v176
                $region52: #{mymodel_forward.1} parent=46 // loop_footer
                  %s159 = sadd.s32 1, %s155
                $region53: #{mymodel_forward.1} parent=46 // loop_footer_branch
                  %154 = sbr.rel target = $region49
                $region54: #{mymodel_forward.1} parent=46 // loop_exit
                  _
              $region47: #{mymodel_forward.1} parent=31 // pred_fallthru
                _
              // Predicated region
              $region55: #{mymodel_forward.1} parent=31 // pred_check
                _
              $region56: #{mymodel_forward.1} parent=31 // pred_check_branch
                %179 = sbr.rel target = $region58
              $region57: #{mymodel_forward.1} parent=31 // pred_region
                _
              $region58: #{mymodel_forward.1} parent=31 // pred_fallthru
                _
            $region32: #{mymodel_forward.1} parent=27 // pred_fallthru
              _
            // Predicated region
            $region33: #{mymodel_forward.1} parent=27 // pred_check
              _
            $region34: #{mymodel_forward.1} parent=27 // pred_check_branch
              %126 = sbr.rel target = $region36
            $region35: #{mymodel_forward.1} parent=27 // pred_region
              loop: start=0, step=1, limit=1
              $region37: #{mymodel_forward.1} parent=35 // loop_pre_header
                _
              $region38: #{mymodel_forward.1} parent=35 // loop_header
                %s129 = sphi 0, %s133
                %p130 = scmp.ge.s32.totalorder %s129, 1
                %s134 = sphi %s120, %s120
                %s135 = sphi %s118, %s118
              $region39: #{mymodel_forward.1} parent=35 // loop_header_branch
                %132 = sbr.rel (%p130) target = $region43
              $region40: #{mymodel_forward.1} parent=35 // loop_body
                %v136 = vld [vmem:[%s134] sm:$0xff]
                %137 = vst [vmem:[%s135] sm:$0xff] %v136
                %v138 = vld [vmem:[%s134 + $0x10] sm:$0xff]
                %139 = vst [vmem:[%s135 + $0x8] sm:$0xff] %v138
                %v140 = vld [vmem:[%s134 + $0x20] sm:$0xff]
                %141 = vst [vmem:[%s135 + $0x10] sm:$0xff] %v140
                %v142 = vld [vmem:[%s134 + $0x30] sm:$0xff]
                %143 = vst [vmem:[%s135 + $0x18] sm:$0xff] %v142
                %v144 = vld [vmem:[%s134 + $0x40] sm:$0xff]
                %145 = vst [vmem:[%s135 + $0x20] sm:$0xff] %v144
                %v146 = vld [vmem:[%s134 + $0x50] sm:$0xff]
                %147 = vst [vmem:[%s135 + $0x28] sm:$0xff] %v146
                %v148 = vld [vmem:[%s134 + $0x60] sm:$0xff]
                %149 = vst [vmem:[%s135 + $0x30] sm:$0xff] %v148
                %v150 = vld [vmem:[%s134 + $0x70] sm:$0xff]
                %151 = vst [vmem:[%s135 + $0x38] sm:$0xff] %v150
              $region41: #{mymodel_forward.1} parent=35 // loop_footer
                %s133 = sadd.s32 1, %s129
              $region42: #{mymodel_forward.1} parent=35 // loop_footer_branch
                %128 = sbr.rel target = $region38
              $region43: #{mymodel_forward.1} parent=35 // loop_exit
                _
            $region36: #{mymodel_forward.1} parent=27 // pred_fallthru
              _
          $region28: #{mymodel_forward.1} parent=23 // pred_fallthru
            _
          %180 = vnop
        $region24: #{mymodel_forward.1} parent=19 // pred_fallthru
          _
      $region20: #{mymodel_forward.1} parent=5 // pred_fallthru
        _
      %p181 = scmp.le.s32.totalorder 1, %s9
      %p182 = scmp.lt.s32.totalorder %s9, 3
      %p183 = pnand %p181, %p182
      %p184 = pneg %p183
      // Predicated region
      $region59: #{mymodel_forward.1} parent=5 // pred_check
        _
      $region60: #{mymodel_forward.1} parent=5 // pred_check_branch
        %186 = sbr.rel (%p183) target = $region62
      $region61: #{mymodel_forward.1} parent=5 // pred_region
        %s187 = ssub.s32 %s9, 1
        %s188 = sand.u32 %s22, 1
        %s189 = sand.u32 %s22, 1
        %s190 = smul.addr %s189, 64
        %s191 = scalar_lea.vmem [#allocation2], %s190
        // Predicated region
        $region63: #{mymodel_forward.1} parent=61 // pred_check
          %p192 = pneg %p35
        $region64: #{mymodel_forward.1} parent=61 // pred_check_branch
          %194 = sbr.rel (%p192) target = $region66
        $region65: #{mymodel_forward.1} parent=61 // pred_region
          _
        $region66: #{mymodel_forward.1} parent=61 // pred_fallthru
          _
        // Predicated region
        $region67: #{mymodel_forward.1} parent=61 // pred_check
          %p195 = pneg %p56
        $region68: #{mymodel_forward.1} parent=61 // pred_check_branch
          %197 = sbr.rel (%p195) target = $region70
        $region69: #{mymodel_forward.1} parent=61 // pred_region
          %198 = dma.done [#allocation4], 16
        $region70: #{mymodel_forward.1} parent=61 // pred_fallthru
          _
        %199 = sfence
        %s200 = sand.u32 %s22, 1
        %s201 = sand.u32 %s22, 1
        %s202 = smul.addr %s201, 64
        %s203 = scalar_lea.vmem [#allocation2], %s202
        %p204 = pneg %p35
        %p205 = pneg %p32
        %p206 = pneg %p56
        %p207 = pneg %p53
        %p208 = pneg %p82
        %p209 = pneg %p79
        %s210 = sand.u32 %s69, 1
        %s211 = sand.u32 %s69, 1
        %s212 = smul.addr %s211, 16
        %s213 = scalar_lea.vmem [#allocation5], %s212
        %v214 = vld [vmem:[%s191] sm:$0xff]
        %s215 = scalar_lea.vmem %s191, 32 [#allocation2]
        %v216 = vld [vmem:[%s215] sm:$0xff]
        %v217 = vmul.f32 %v214, %v214
        %v218 = vmul.f32 %v216, %v216
        %v219 = vadd.f32 %v217, %v218
        %v220 = vrsqrt.pop %v219
        %v221 = vmul.f32 %v219, %v220
        %vm222 = vcmp.eq.f32.partialorder %v219, inf
        %v223 = vsel %vm222, %v219, %v221
        %vm224 = vcmp.eq.f32.partialorder %v219, 0.0
        %v225 = vand.u32 %v219, 2147483648
        %v226 = vsel %vm224, %v225, %v223
        %s227 = sld [smem:[#allocation3]]
        %v228 = vstv %s227
        %v229 = vsub.f32 %v226, %v228
        %s230 = sld [smem:[#allocation3 + $0x10]]
        %v231 = vstv %s230
        %v232 = vsub.f32 %v226, %v231
        %s233 = sld [smem:[#allocation3 + $0x40]]
        %v234 = vmul.f32 %v229, %v229
        %s235 = sld [smem:[#allocation3 + $0x20]]
        %v236 = vstv %s235
        %v237 = vmul.f32 %v234, %v236
        %v238 = vmul.f32 %v237, 1.442695
        %v239 = vpow.pop %v238
        %v240 = vstv %s233
        %v241 = vmul.f32 %v240, %v239
        %s242 = sld [smem:[#allocation3 + $0x50]]
        %v243 = vmul.f32 %v232, %v232
        %s244 = sld [smem:[#allocation3 + $0x30]]
        %v245 = vstv %s244
        %v246 = vmul.f32 %v243, %v245
        %v247 = vmul.f32 %v246, 1.442695
        %v248 = vpow.pop %v247
        %v249 = vstv %s242
        %v250 = vmul.f32 %v249, %v248
        %s251 = sld [smem:[#allocation3 + $0x1]]
        %v252 = vstv %s251
        %v253 = vsub.f32 %v226, %v252
        %s254 = sld [smem:[#allocation3 + $0x11]]
        %v255 = vstv %s254
        %v256 = vsub.f32 %v226, %v255
        %s257 = sld [smem:[#allocation3 + $0x41]]
        %v258 = vmul.f32 %v253, %v253
        %s259 = sld [smem:[#allocation3 + $0x21]]
        %v260 = vstv %s259
        %v261 = vmul.f32 %v258, %v260
        %v262 = vmul.f32 %v261, 1.442695
        %v263 = vpow.pop %v262
        %v264 = vstv %s257
        %v265 = vmul.f32 %v264, %v263
        %s266 = sld [smem:[#allocation3 + $0x51]]
        %v267 = vmul.f32 %v256, %v256
        %s268 = sld [smem:[#allocation3 + $0x31]]
        %v269 = vstv %s268
        %v270 = vmul.f32 %v267, %v269
        %v271 = vmul.f32 %v270, 1.442695
        %v272 = vpow.pop %v271
        %v273 = vstv %s266
        %v274 = vmul.f32 %v273, %v272
        %v275 = vadd.f32 %v241, %v265
        %v276 = vadd.f32 %v250, %v274
        %s277 = sld [smem:[#allocation3 + $0x2]]
        %v278 = vstv %s277
        %v279 = vsub.f32 %v226, %v278
        %s280 = sld [smem:[#allocation3 + $0x12]]
        %v281 = vstv %s280
        %v282 = vsub.f32 %v226, %v281
        %s283 = sld [smem:[#allocation3 + $0x42]]
        %v284 = vmul.f32 %v279, %v279
        %s285 = sld [smem:[#allocation3 + $0x22]]
        %v286 = vstv %s285
        %v287 = vmul.f32 %v284, %v286
        %v288 = vmul.f32 %v287, 1.442695
        %v289 = vpow.pop %v288
        %v290 = vstv %s283
        %v291 = vmul.f32 %v290, %v289
        %s292 = sld [smem:[#allocation3 + $0x52]]
        %v293 = vmul.f32 %v282, %v282
        %s294 = sld [smem:[#allocation3 + $0x32]]
        %v295 = vstv %s294
        %v296 = vmul.f32 %v293, %v295
        %v297 = vmul.f32 %v296, 1.442695
        %v298 = vpow.pop %v297
        %v299 = vstv %s292
        %v300 = vmul.f32 %v299, %v298
        %v301 = vadd.f32 %v275, %v291
        %v302 = vadd.f32 %v276, %v300
        %s303 = sld [smem:[#allocation3 + $0x3]]
        %v304 = vstv %s303
        %v305 = vsub.f32 %v226, %v304
        %s306 = sld [smem:[#allocation3 + $0x13]]
        %v307 = vstv %s306
        %v308 = vsub.f32 %v226, %v307
        %s309 = sld [smem:[#allocation3 + $0x43]]
        %v310 = vmul.f32 %v305, %v305
        %s311 = sld [smem:[#allocation3 + $0x23]]
        %v312 = vstv %s311
        %v313 = vmul.f32 %v310, %v312
        %v314 = vmul.f32 %v313, 1.442695
        %v315 = vpow.pop %v314
        %v316 = vstv %s309
        %v317 = vmul.f32 %v316, %v315
        %s318 = sld [smem:[#allocation3 + $0x53]]
        %v319 = vmul.f32 %v308, %v308
        %s320 = sld [smem:[#allocation3 + $0x33]]
        %v321 = vstv %s320
        %v322 = vmul.f32 %v319, %v321
        %v323 = vmul.f32 %v322, 1.442695
        %v324 = vpow.pop %v323
        %v325 = vstv %s318
        %v326 = vmul.f32 %v325, %v324
        %v327 = vadd.f32 %v301, %v317
        %v328 = vadd.f32 %v302, %v326
        %v329 = vmul.f32 %v327, %v214
        %v330 = vmul.f32 %v328, %v216
        %v331 = vsub.f32 %v329, %v330
        %v332 = vadd.f32 %v331, %v214
        %v333 = vmul.f32 %v327, %v216
        %v334 = vmul.f32 %v328, %v214
        %v335 = vadd.f32 %v333, %v334
        %v336 = vadd.f32 %v335, %v216
        %s337 = sld [smem:[#allocation3 + $0x60]]
        %s338 = sld [smem:[#allocation3 + $0x64]]
        %v339 = vstv %s337
        %v340 = vmul.f32 %v339, %v332
        %v341 = vstv %s338
        %v342 = vmul.f32 %v341, %v336
        %v343 = vsub.f32 %v340, %v342
        %v344 = vmul.f32 %v339, %v336
        %v345 = vmul.f32 %v341, %v332
        %v346 = vadd.f32 %v344, %v345
        %s347 = scalar_lea.vmem %s191, 8 [#allocation2]
        %v348 = vld [vmem:[%s347] sm:$0xff]
        %s349 = scalar_lea.vmem %s191, 40 [#allocation2]
        %v350 = vld [vmem:[%s349] sm:$0xff]
        %v351 = vmul.f32 %v348, %v348
        %v352 = vmul.f32 %v350, %v350
        %v353 = vadd.f32 %v351, %v352
        %v354 = vrsqrt.pop %v353
        %v355 = vmul.f32 %v353, %v354
        %vm356 = vcmp.eq.f32.partialorder %v353, inf
        %v357 = vsel %vm356, %v353, %v355
        %vm358 = vcmp.eq.f32.partialorder %v353, 0.0
        %v359 = vand.u32 %v353, 2147483648
        %v360 = vsel %vm358, %v359, %v357
        %s361 = sld [smem:[#allocation3 + $0x4]]
        %v362 = vstv %s361
        %v363 = vsub.f32 %v360, %v362
        %s364 = sld [smem:[#allocation3 + $0x14]]
        %v365 = vstv %s364
        %v366 = vsub.f32 %v360, %v365
        %s367 = sld [smem:[#allocation3 + $0x44]]
        %v368 = vmul.f32 %v363, %v363
        %s369 = sld [smem:[#allocation3 + $0x24]]
        %v370 = vstv %s369
        %v371 = vmul.f32 %v368, %v370
        %v372 = vmul.f32 %v371, 1.442695
        %v373 = vpow.pop %v372
        %v374 = vstv %s367
        %v375 = vmul.f32 %v374, %v373
        %s376 = sld [smem:[#allocation3 + $0x54]]
        %v377 = vmul.f32 %v366, %v366
        %s378 = sld [smem:[#allocation3 + $0x34]]
        %v379 = vstv %s378
        %v380 = vmul.f32 %v377, %v379
        %v381 = vmul.f32 %v380, 1.442695
        %v382 = vpow.pop %v381
        %v383 = vstv %s376
        %v384 = vmul.f32 %v383, %v382
        %s385 = sld [smem:[#allocation3 + $0x5]]
        %v386 = vstv %s385
        %v387 = vsub.f32 %v360, %v386
        %s388 = sld [smem:[#allocation3 + $0x15]]
        %v389 = vstv %s388
        %v390 = vsub.f32 %v360, %v389
        %s391 = sld [smem:[#allocation3 + $0x45]]
        %v392 = vmul.f32 %v387, %v387
        %s393 = sld [smem:[#allocation3 + $0x25]]
        %v394 = vstv %s393
        %v395 = vmul.f32 %v392, %v394
        %v396 = vmul.f32 %v395, 1.442695
        %v397 = vpow.pop %v396
        %v398 = vstv %s391
        %v399 = vmul.f32 %v398, %v397
        %s400 = sld [smem:[#allocation3 + $0x55]]
        %v401 = vmul.f32 %v390, %v390
        %s402 = sld [smem:[#allocation3 + $0x35]]
        %v403 = vstv %s402
        %v404 = vmul.f32 %v401, %v403
        %v405 = vmul.f32 %v404, 1.442695
        %v406 = vpow.pop %v405
        %v407 = vstv %s400
        %v408 = vmul.f32 %v407, %v406
        %v409 = vadd.f32 %v375, %v399
        %v410 = vadd.f32 %v384, %v408
        %s411 = sld [smem:[#allocation3 + $0x6]]
        %v412 = vstv %s411
        %v413 = vsub.f32 %v360, %v412
        %s414 = sld [smem:[#allocation3 + $0x16]]
        %v415 = vstv %s414
        %v416 = vsub.f32 %v360, %v415
        %s417 = sld [smem:[#allocation3 + $0x46]]
        %v418 = vmul.f32 %v413, %v413
        %s419 = sld [smem:[#allocation3 + $0x26]]
        %v420 = vstv %s419
        %v421 = vmul.f32 %v418, %v420
        %v422 = vmul.f32 %v421, 1.442695
        %v423 = vpow.pop %v422
        %v424 = vstv %s417
        %v425 = vmul.f32 %v424, %v423
        %s426 = sld [smem:[#allocation3 + $0x56]]
        %v427 = vmul.f32 %v416, %v416
        %s428 = sld [smem:[#allocation3 + $0x36]]
        %v429 = vstv %s428
        %v430 = vmul.f32 %v427, %v429
        %v431 = vmul.f32 %v430, 1.442695
        %v432 = vpow.pop %v431
        %v433 = vstv %s426
        %v434 = vmul.f32 %v433, %v432
        %v435 = vadd.f32 %v409, %v425
        %v436 = vadd.f32 %v410, %v434
        %s437 = sld [smem:[#allocation3 + $0x7]]
        %v438 = vstv %s437
        %v439 = vsub.f32 %v360, %v438
        %s440 = sld [smem:[#allocation3 + $0x17]]
        %v441 = vstv %s440
        %v442 = vsub.f32 %v360, %v441
        %s443 = sld [smem:[#allocation3 + $0x47]]
        %v444 = vmul.f32 %v439, %v439
        %s445 = sld [smem:[#allocation3 + $0x27]]
        %v446 = vstv %s445
        %v447 = vmul.f32 %v444, %v446
        %v448 = vmul.f32 %v447, 1.442695
        %v449 = vpow.pop %v448
        %v450 = vstv %s443
        %v451 = vmul.f32 %v450, %v449
        %s452 = sld [smem:[#allocation3 + $0x57]]
        %v453 = vmul.f32 %v442, %v442
        %s454 = sld [smem:[#allocation3 + $0x37]]
        %v455 = vstv %s454
        %v456 = vmul.f32 %v453, %v455
        %v457 = vmul.f32 %v456, 1.442695
        %v458 = vpow.pop %v457
        %v459 = vstv %s452
        %v460 = vmul.f32 %v459, %v458
        %v461 = vadd.f32 %v435, %v451
        %v462 = vadd.f32 %v436, %v460
        %v463 = vmul.f32 %v461, %v348
        %v464 = vmul.f32 %v462, %v350
        %v465 = vsub.f32 %v463, %v464
        %v466 = vadd.f32 %v465, %v348
        %v467 = vmul.f32 %v461, %v350
        %v468 = vmul.f32 %v462, %v348
        %v469 = vadd.f32 %v467, %v468
        %v470 = vadd.f32 %v469, %v350
        %s471 = sld [smem:[#allocation3 + $0x61]]
        %s472 = sld [smem:[#allocation3 + $0x65]]
        %v473 = vstv %s471
        %v474 = vmul.f32 %v473, %v466
        %v475 = vstv %s472
        %v476 = vmul.f32 %v475, %v470
        %v477 = vsub.f32 %v474, %v476
        %v478 = vmul.f32 %v473, %v470
        %v479 = vmul.f32 %v475, %v466
        %v480 = vadd.f32 %v478, %v479
        %v481 = vadd.f32 %v343, %v477
        %v482 = vadd.f32 %v346, %v480
        %s483 = scalar_lea.vmem %s191, 16 [#allocation2]
        %v484 = vld [vmem:[%s483] sm:$0xff]
        %s485 = scalar_lea.vmem %s191, 48 [#allocation2]
        %v486 = vld [vmem:[%s485] sm:$0xff]
        %v487 = vmul.f32 %v484, %v484
        %v488 = vmul.f32 %v486, %v486
        %v489 = vadd.f32 %v487, %v488
        %v490 = vrsqrt.pop %v489
        %v491 = vmul.f32 %v489, %v490
        %vm492 = vcmp.eq.f32.partialorder %v489, inf
        %v493 = vsel %vm492, %v489, %v491
        %vm494 = vcmp.eq.f32.partialorder %v489, 0.0
        %v495 = vand.u32 %v489, 2147483648
        %v496 = vsel %vm494, %v495, %v493
        %s497 = sld [smem:[#allocation3 + $0x8]]
        %v498 = vstv %s497
        %v499 = vsub.f32 %v496, %v498
        %s500 = sld [smem:[#allocation3 + $0x18]]
        %v501 = vstv %s500
        %v502 = vsub.f32 %v496, %v501
        %s503 = sld [smem:[#allocation3 + $0x48]]
        %v504 = vmul.f32 %v499, %v499
        %s505 = sld [smem:[#allocation3 + $0x28]]
        %v506 = vstv %s505
        %v507 = vmul.f32 %v504, %v506
        %v508 = vmul.f32 %v507, 1.442695
        %v509 = vpow.pop %v508
        %v510 = vstv %s503
        %v511 = vmul.f32 %v510, %v509
        %s512 = sld [smem:[#allocation3 + $0x58]]
        %v513 = vmul.f32 %v502, %v502
        %s514 = sld [smem:[#allocation3 + $0x38]]
        %v515 = vstv %s514
        %v516 = vmul.f32 %v513, %v515
        %v517 = vmul.f32 %v516, 1.442695
        %v518 = vpow.pop %v517
        %v519 = vstv %s512
        %v520 = vmul.f32 %v519, %v518
        %s521 = sld [smem:[#allocation3 + $0x9]]
        %v522 = vstv %s521
        %v523 = vsub.f32 %v496, %v522
        %s524 = sld [smem:[#allocation3 + $0x19]]
        %v525 = vstv %s524
        %v526 = vsub.f32 %v496, %v525
        %s527 = sld [smem:[#allocation3 + $0x49]]
        %v528 = vmul.f32 %v523, %v523
        %s529 = sld [smem:[#allocation3 + $0x29]]
        %v530 = vstv %s529
        %v531 = vmul.f32 %v528, %v530
        %v532 = vmul.f32 %v531, 1.442695
        %v533 = vpow.pop %v532
        %v534 = vstv %s527
        %v535 = vmul.f32 %v534, %v533
        %s536 = sld [smem:[#allocation3 + $0x59]]
        %v537 = vmul.f32 %v526, %v526
        %s538 = sld [smem:[#allocation3 + $0x39]]
        %v539 = vstv %s538
        %v540 = vmul.f32 %v537, %v539
        %v541 = vmul.f32 %v540, 1.442695
        %v542 = vpow.pop %v541
        %v543 = vstv %s536
        %v544 = vmul.f32 %v543, %v542
        %v545 = vadd.f32 %v511, %v535
        %v546 = vadd.f32 %v520, %v544
        %s547 = sld [smem:[#allocation3 + $0xa]]
        %v548 = vstv %s547
        %v549 = vsub.f32 %v496, %v548
        %s550 = sld [smem:[#allocation3 + $0x1a]]
        %v551 = vstv %s550
        %v552 = vsub.f32 %v496, %v551
        %s553 = sld [smem:[#allocation3 + $0x4a]]
        %v554 = vmul.f32 %v549, %v549
        %s555 = sld [smem:[#allocation3 + $0x2a]]
        %v556 = vstv %s555
        %v557 = vmul.f32 %v554, %v556
        %v558 = vmul.f32 %v557, 1.442695
        %v559 = vpow.pop %v558
        %v560 = vstv %s553
        %v561 = vmul.f32 %v560, %v559
        %s562 = sld [smem:[#allocation3 + $0x5a]]
        %v563 = vmul.f32 %v552, %v552
        %s564 = sld [smem:[#allocation3 + $0x3a]]
        %v565 = vstv %s564
        %v566 = vmul.f32 %v563, %v565
        %v567 = vmul.f32 %v566, 1.442695
        %v568 = vpow.pop %v567
        %v569 = vstv %s562
        %v570 = vmul.f32 %v569, %v568
        %v571 = vadd.f32 %v545, %v561
        %v572 = vadd.f32 %v546, %v570
        %s573 = sld [smem:[#allocation3 + $0xb]]
        %v574 = vstv %s573
        %v575 = vsub.f32 %v496, %v574
        %s576 = sld [smem:[#allocation3 + $0x1b]]
        %v577 = vstv %s576
        %v578 = vsub.f32 %v496, %v577
        %s579 = sld [smem:[#allocation3 + $0x4b]]
        %v580 = vmul.f32 %v575, %v575
        %s581 = sld [smem:[#allocation3 + $0x2b]]
        %v582 = vstv %s581
        %v583 = vmul.f32 %v580, %v582
        %v584 = vmul.f32 %v583, 1.442695
        %v585 = vpow.pop %v584
        %v586 = vstv %s579
        %v587 = vmul.f32 %v586, %v585
        %s588 = sld [smem:[#allocation3 + $0x5b]]
        %v589 = vmul.f32 %v578, %v578
        %s590 = sld [smem:[#allocation3 + $0x3b]]
        %v591 = vstv %s590
        %v592 = vmul.f32 %v589, %v591
        %v593 = vmul.f32 %v592, 1.442695
        %v594 = vpow.pop %v593
        %v595 = vstv %s588
        %v596 = vmul.f32 %v595, %v594
        %v597 = vadd.f32 %v571, %v587
        %v598 = vadd.f32 %v572, %v596
        %v599 = vmul.f32 %v597, %v484
        %v600 = vmul.f32 %v598, %v486
        %v601 = vsub.f32 %v599, %v600
        %v602 = vadd.f32 %v601, %v484
        %v603 = vmul.f32 %v597, %v486
        %v604 = vmul.f32 %v598, %v484
        %v605 = vadd.f32 %v603, %v604
        %v606 = vadd.f32 %v605, %v486
        %s607 = sld [smem:[#allocation3 + $0x62]]
        %s608 = sld [smem:[#allocation3 + $0x66]]
        %v609 = vstv %s607
        %v610 = vmul.f32 %v609, %v602
        %v611 = vstv %s608
        %v612 = vmul.f32 %v611, %v606
        %v613 = vsub.f32 %v610, %v612
        %v614 = vmul.f32 %v609, %v606
        %v615 = vmul.f32 %v611, %v602
        %v616 = vadd.f32 %v614, %v615
        %v617 = vadd.f32 %v481, %v613
        %v618 = vadd.f32 %v482, %v616
        %s619 = scalar_lea.vmem %s191, 24 [#allocation2]
        %v620 = vld [vmem:[%s619] sm:$0xff]
        %s621 = scalar_lea.vmem %s191, 56 [#allocation2]
        %v622 = vld [vmem:[%s621] sm:$0xff]
        %v623 = vmul.f32 %v620, %v620
        %v624 = vmul.f32 %v622, %v622
        %v625 = vadd.f32 %v623, %v624
        %v626 = vrsqrt.pop %v625
        %v627 = vmul.f32 %v625, %v626
        %vm628 = vcmp.eq.f32.partialorder %v625, inf
        %v629 = vsel %vm628, %v625, %v627
        %vm630 = vcmp.eq.f32.partialorder %v625, 0.0
        %v631 = vand.u32 %v625, 2147483648
        %v632 = vsel %vm630, %v631, %v629
        %s633 = sld [smem:[#allocation3 + $0xc]]
        %v634 = vstv %s633
        %v635 = vsub.f32 %v632, %v634
        %s636 = sld [smem:[#allocation3 + $0x1c]]
        %v637 = vstv %s636
        %v638 = vsub.f32 %v632, %v637
        %s639 = sld [smem:[#allocation3 + $0x4c]]
        %v640 = vmul.f32 %v635, %v635
        %s641 = sld [smem:[#allocation3 + $0x2c]]
        %v642 = vstv %s641
        %v643 = vmul.f32 %v640, %v642
        %v644 = vmul.f32 %v643, 1.442695
        %v645 = vpow.pop %v644
        %v646 = vstv %s639
        %v647 = vmul.f32 %v646, %v645
        %s648 = sld [smem:[#allocation3 + $0x5c]]
        %v649 = vmul.f32 %v638, %v638
        %s650 = sld [smem:[#allocation3 + $0x3c]]
        %v651 = vstv %s650
        %v652 = vmul.f32 %v649, %v651
        %v653 = vmul.f32 %v652, 1.442695
        %v654 = vpow.pop %v653
        %v655 = vstv %s648
        %v656 = vmul.f32 %v655, %v654
        %s657 = sld [smem:[#allocation3 + $0xd]]
        %v658 = vstv %s657
        %v659 = vsub.f32 %v632, %v658
        %s660 = sld [smem:[#allocation3 + $0x1d]]
        %v661 = vstv %s660
        %v662 = vsub.f32 %v632, %v661
        %s663 = sld [smem:[#allocation3 + $0x4d]]
        %v664 = vmul.f32 %v659, %v659
        %s665 = sld [smem:[#allocation3 + $0x2d]]
        %v666 = vstv %s665
        %v667 = vmul.f32 %v664, %v666
        %v668 = vmul.f32 %v667, 1.442695
        %v669 = vpow.pop %v668
        %v670 = vstv %s663
        %v671 = vmul.f32 %v670, %v669
        %s672 = sld [smem:[#allocation3 + $0x5d]]
        %v673 = vmul.f32 %v662, %v662
        %s674 = sld [smem:[#allocation3 + $0x3d]]
        %v675 = vstv %s674
        %v676 = vmul.f32 %v673, %v675
        %v677 = vmul.f32 %v676, 1.442695
        %v678 = vpow.pop %v677
        %v679 = vstv %s672
        %v680 = vmul.f32 %v679, %v678
        %v681 = vadd.f32 %v647, %v671
        %v682 = vadd.f32 %v656, %v680
        %s683 = sld [smem:[#allocation3 + $0xe]]
        %v684 = vstv %s683
        %v685 = vsub.f32 %v632, %v684
        %s686 = sld [smem:[#allocation3 + $0x1e]]
        %v687 = vstv %s686
        %v688 = vsub.f32 %v632, %v687
        %s689 = sld [smem:[#allocation3 + $0x4e]]
        %v690 = vmul.f32 %v685, %v685
        %s691 = sld [smem:[#allocation3 + $0x2e]]
        %v692 = vstv %s691
        %v693 = vmul.f32 %v690, %v692
        %v694 = vmul.f32 %v693, 1.442695
        %v695 = vpow.pop %v694
        %v696 = vstv %s689
        %v697 = vmul.f32 %v696, %v695
        %s698 = sld [smem:[#allocation3 + $0x5e]]
        %v699 = vmul.f32 %v688, %v688
        %s700 = sld [smem:[#allocation3 + $0x3e]]
        %v701 = vstv %s700
        %v702 = vmul.f32 %v699, %v701
        %v703 = vmul.f32 %v702, 1.442695
        %v704 = vpow.pop %v703
        %v705 = vstv %s698
        %v706 = vmul.f32 %v705, %v704
        %v707 = vadd.f32 %v681, %v697
        %v708 = vadd.f32 %v682, %v706
        %s709 = sld [smem:[#allocation3 + $0xf]]
        %v710 = vstv %s709
        %v711 = vsub.f32 %v632, %v710
        %s712 = sld [smem:[#allocation3 + $0x1f]]
        %v713 = vstv %s712
        %v714 = vsub.f32 %v632, %v713
        %s715 = sld [smem:[#allocation3 + $0x4f]]
        %v716 = vmul.f32 %v711, %v711
        %s717 = sld [smem:[#allocation3 + $0x2f]]
        %v718 = vstv %s717
        %v719 = vmul.f32 %v716, %v718
        %v720 = vmul.f32 %v719, 1.442695
        %v721 = vpow.pop %v720
        %v722 = vstv %s715
        %v723 = vmul.f32 %v722, %v721
        %s724 = sld [smem:[#allocation3 + $0x5f]]
        %v725 = vmul.f32 %v714, %v714
        %s726 = sld [smem:[#allocation3 + $0x3f]]
        %v727 = vstv %s726
        %v728 = vmul.f32 %v725, %v727
        %v729 = vmul.f32 %v728, 1.442695
        %v730 = vpow.pop %v729
        %v731 = vstv %s724
        %v732 = vmul.f32 %v731, %v730
        %v733 = vadd.f32 %v707, %v723
        %v734 = vadd.f32 %v708, %v732
        %v735 = vmul.f32 %v733, %v620
        %v736 = vmul.f32 %v734, %v622
        %v737 = vsub.f32 %v735, %v736
        %v738 = vadd.f32 %v737, %v620
        %v739 = vmul.f32 %v733, %v622
        %v740 = vmul.f32 %v734, %v620
        %v741 = vadd.f32 %v739, %v740
        %v742 = vadd.f32 %v741, %v622
        %s743 = sld [smem:[#allocation3 + $0x63]]
        %s744 = sld [smem:[#allocation3 + $0x67]]
        %v745 = vstv %s743
        %v746 = vmul.f32 %v745, %v738
        %v747 = vstv %s744
        %v748 = vmul.f32 %v747, %v742
        %v749 = vsub.f32 %v746, %v748
        %v750 = vmul.f32 %v745, %v742
        %v751 = vmul.f32 %v747, %v738
        %v752 = vadd.f32 %v750, %v751
        %v753 = vadd.f32 %v617, %v749
        %v754 = vadd.f32 %v618, %v752
        %755 = vst [vmem:[%s213] sm:$0xff] %v753
        %s756 = scalar_lea.vmem %s213, 8 [#allocation5]
        %757 = vst [vmem:[%s756] sm:$0xff] %v754
        %s758 = sand.u32 %s69, 1
        %s759 = sand.u32 %s69, 1
        %s760 = smul.addr %s759, 16
        %s761 = scalar_lea.vmem [#allocation5], %s760
        // Predicated region
        $region71: #{mymodel_forward.1} parent=61 // pred_check
          %p762 = pneg %p79
        $region72: #{mymodel_forward.1} parent=61 // pred_check_branch
          %764 = sbr.rel (%p762) target = $region74
        $region73: #{mymodel_forward.1} parent=61 // pred_region
          %s765 = smul.addr %s14, 8
          %s766 = scalar_lea.vmem %s2, %s765
          // Predicated region
          $region75: #{mymodel_forward.1} parent=73 // pred_check
            _
          $region76: #{mymodel_forward.1} parent=73 // pred_check_branch
            %768 = sbr.rel (0) target = $region78
          $region77: #{mymodel_forward.1} parent=73 // pred_region
            // Predicated region
            $region79: #{mymodel_forward.1} parent=77 // pred_check
              _
            $region80: #{mymodel_forward.1} parent=77 // pred_check_branch
              %770 = sbr.rel (0) target = $region82
            $region81: #{mymodel_forward.1} parent=77 // pred_region
              // Predicated region
              $region94: #{mymodel_forward.1} parent=81 // pred_check
                _
              $region95: #{mymodel_forward.1} parent=81 // pred_check_branch
                %787 = sbr.rel (0) target = $region97
              $region96: #{mymodel_forward.1} parent=81 // pred_region
                loop: start=0, step=1, limit=1
                $region98: #{mymodel_forward.1} parent=96 // loop_pre_header
                  _
                $region99: #{mymodel_forward.1} parent=96 // loop_header
                  %s789 = sphi 0, %s793
                  %p790 = scmp.ge.s32.totalorder %s789, 1
                  %s794 = sphi %s761, %s761
                  %s795 = sphi %s766, %s766
                $region100: #{mymodel_forward.1} parent=96 // loop_header_branch
                  %792 = sbr.rel (%p790) target = $region104
                $region101: #{mymodel_forward.1} parent=96 // loop_body
                  %v796 = vld [vmem:[%s794] sm:$0xff]
                  %797 = vst [vmem:[%s795] sm:$0xff] %v796
                  %v798 = vld [vmem:[%s794 + $0x8] sm:$0xff]
                  %799 = vst [vmem:[%s795 + $0x10] sm:$0xff] %v798
                $region102: #{mymodel_forward.1} parent=96 // loop_footer
                  %s793 = sadd.s32 1, %s789
                $region103: #{mymodel_forward.1} parent=96 // loop_footer_branch
                  %788 = sbr.rel target = $region99
                $region104: #{mymodel_forward.1} parent=96 // loop_exit
                  _
              $region97: #{mymodel_forward.1} parent=81 // pred_fallthru
                _
              // Predicated region
              $region105: #{mymodel_forward.1} parent=81 // pred_check
                _
              $region106: #{mymodel_forward.1} parent=81 // pred_check_branch
                %801 = sbr.rel target = $region108
              $region107: #{mymodel_forward.1} parent=81 // pred_region
                _
              $region108: #{mymodel_forward.1} parent=81 // pred_fallthru
                _
            $region82: #{mymodel_forward.1} parent=77 // pred_fallthru
              _
            // Predicated region
            $region83: #{mymodel_forward.1} parent=77 // pred_check
              _
            $region84: #{mymodel_forward.1} parent=77 // pred_check_branch
              %772 = sbr.rel target = $region86
            $region85: #{mymodel_forward.1} parent=77 // pred_region
              loop: start=0, step=1, limit=1
              $region87: #{mymodel_forward.1} parent=85 // loop_pre_header
                _
              $region88: #{mymodel_forward.1} parent=85 // loop_header
                %s775 = sphi 0, %s779
                %p776 = scmp.ge.s32.totalorder %s775, 1
                %s780 = sphi %s761, %s761
                %s781 = sphi %s766, %s766
              $region89: #{mymodel_forward.1} parent=85 // loop_header_branch
                %778 = sbr.rel (%p776) target = $region93
              $region90: #{mymodel_forward.1} parent=85 // loop_body
                %v782 = vld [vmem:[%s780] sm:$0xff]
                %783 = vst [vmem:[%s781] sm:$0xff] %v782
                %v784 = vld [vmem:[%s780 + $0x8] sm:$0xff]
                %785 = vst [vmem:[%s781 + $0x10] sm:$0xff] %v784
              $region91: #{mymodel_forward.1} parent=85 // loop_footer
                %s779 = sadd.s32 1, %s775
              $region92: #{mymodel_forward.1} parent=85 // loop_footer_branch
                %774 = sbr.rel target = $region88
              $region93: #{mymodel_forward.1} parent=85 // loop_exit
                _
            $region86: #{mymodel_forward.1} parent=77 // pred_fallthru
              _
          $region78: #{mymodel_forward.1} parent=73 // pred_fallthru
            _
          %802 = vnop
        $region74: #{mymodel_forward.1} parent=61 // pred_fallthru
          _
      $region62: #{mymodel_forward.1} parent=5 // pred_fallthru
        _
      %p803 = scmp.le.s32.totalorder 2, %s9
      // Predicated region
      $region109: #{mymodel_forward.1} parent=5 // pred_check
        %p804 = pneg %p803
      $region110: #{mymodel_forward.1} parent=5 // pred_check_branch
        %806 = sbr.rel (%p804) target = $region112
      $region111: #{mymodel_forward.1} parent=5 // pred_region
        %s807 = ssub.s32 %s9, 2
        // Predicated region
        $region113: #{mymodel_forward.1} parent=111 // pred_check
          %p808 = pneg %p85
        $region114: #{mymodel_forward.1} parent=111 // pred_check_branch
          %810 = sbr.rel (%p808) target = $region116
        $region115: #{mymodel_forward.1} parent=111 // pred_region
          %s811 = sand.u32 %s70, 1
          %s812 = sand.u32 %s70, 1
          %s813 = smul.addr %s812, 16
          %s814 = scalar_lea.vmem [#allocation5], %s813
        $region116: #{mymodel_forward.1} parent=111 // pred_fallthru
          _
      $region112: #{mymodel_forward.1} parent=5 // pred_fallthru
        _
    $region6: #{mymodel_forward.1} parent=1 // loop_footer
      %s13 = sadd.s32 1, %s9
    $region7: #{mymodel_forward.1} parent=1 // loop_footer_branch
      %8 = sbr.rel target = $region3
    $region8: #{mymodel_forward.1} parent=1 // loop_exit
      _
    %815 = vsyncpa [#allocation4], 1
    %s816 = scalar_lea.sflag [#allocation4], 1
    %817 = vsyncpa %s816, 1

</llo_original>
